<compile_context>
chip_gen: v7x
topology: tpu7x:2x2x1
jax: 0.10.0
libtpu: 0.0.40
codegen_flags: <defaults>
</compile_context>

<pallas_src>
import functools

import jax
import jax.numpy as jnp
from jax.experimental import pallas as pl
from jax.experimental.pallas import tpu as pltpu

NEG_SLOPE = 0.01  # LeakyReLU slope used by the Discriminator.


# ---------------------------------------------------------------------------
# Generic Pallas GEMM + epilogue kernel (shared by every conv layer).
# ---------------------------------------------------------------------------
def _gemm_epilogue_kernel(x_ref, w_ref, b_ref, o_ref, acc_ref, *,
                          apply_leaky, negative_slope):
    """o = act(x @ w + b), accumulating over the K grid axis in f32."""
    @pl.when(pl.program_id(1) == 0)
    def _init():
        acc_ref[...] = jnp.zeros_like(acc_ref)

    acc_ref[...] += jnp.dot(x_ref[...], w_ref[...],
                            preferred_element_type=jnp.float32)

    @pl.when(pl.program_id(1) == pl.num_programs(1) - 1)
    def _epilogue():
        y = acc_ref[...] + b_ref[...]            # f32 epilogue on the accumulator
        if apply_leaky:
            y = jnp.where(y > 0, y, negative_slope * y)
        o_ref[...] = y.astype(o_ref.dtype)


def _pick_tile(n, cap, align):
    """Largest tile <= cap that divides n and is `align`-aligned, else full n."""
    if n <= cap:
        return n
    d = (cap // align) * align
    while d >= align:
        if n % d == 0:
            return d
        d -= align
    return n


def _vmem_limit_bytes(tm, tk, n, itemsize):
    need = 2 * (tm * tk + tk * n + tm * n) * itemsize    # double-buffered blocks
    need += tm * n * 4 + 2 * n * 4                       # f32 accumulator + bias
    need = int(need * 1.5) + (4 << 20)                   # headroom
    return max(16 << 20, min(need, 48 << 20))


def _matmul_bias_act(lhs, w_mat, b_row, *, apply_leaky):
    """(M, K) @ (K, N) + b with optional LeakyReLU, via the Pallas kernel."""
    M, Kd = lhs.shape
    _, N = w_mat.shape
    tm = _pick_tile(M, 256, 8)        # row tile (sublane dim): /8 or full
    tk = _pick_tile(Kd, 2048, 128)    # contraction tile (lane dim): /128 or full
    grid = (M // tm, Kd // tk)

    kernel = functools.partial(_gemm_epilogue_kernel,
                               apply_leaky=apply_leaky,
                               negative_slope=NEG_SLOPE)
    return pl.pallas_call(
        kernel,
        out_shape=jax.ShapeDtypeStruct((M, N), lhs.dtype),
        grid_spec=pltpu.PrefetchScalarGridSpec(
            num_scalar_prefetch=0,
            grid=grid,
            in_specs=[
                pl.BlockSpec((tm, tk), lambda i, k: (i, k)),   # activations
                pl.BlockSpec((tk, N), lambda i, k: (k, 0)),    # weights
                pl.BlockSpec((1, N), lambda i, k: (0, 0)),     # bias row
            ],
            out_specs=pl.BlockSpec((tm, N), lambda i, k: (i, 0)),
            scratch_shapes=[pltpu.VMEM((tm, N), jnp.float32)],
        ),
        compiler_params=pltpu.CompilerParams(
            dimension_semantics=("parallel", "arbitrary"),
            vmem_limit_bytes=_vmem_limit_bytes(tm, tk, N, lhs.dtype.itemsize),
        ),
    )(lhs, w_mat, b_row)


# ---------------------------------------------------------------------------
# Conv2d as im2col + Pallas GEMM.
# ---------------------------------------------------------------------------
def _im2col(x_nhwc, kh, kw, stride, padding):
    """Extract conv patches -> (B, OH, OW, kh*kw*C).  Pure data movement."""
    B, H, W, C = x_nhwc.shape
    xp = jnp.pad(x_nhwc, ((0, 0), (padding, padding), (padding, padding), (0, 0)))
    OH = (H + 2 * padding - kh) // stride + 1
    OW = (W + 2 * padding - kw) // stride + 1
    cols = []
    for ky in range(kh):
        for kx in range(kw):
            cols.append(jax.lax.slice(
                xp,
                (0, ky, kx, 0),
                (B, ky + stride * (OH - 1) + 1, kx + stride * (OW - 1) + 1, C),
                (1, stride, stride, 1)))
    return jnp.concatenate(cols, axis=-1), OH, OW


def conv2d_pallas(x_nhwc, w_oihw, bias, *, stride, padding, leaky,
                  pad_cout_to=None):
    """PyTorch-style Conv2d (OIHW weights) on an NHWC input as a Pallas GEMM."""
    B, H, W, CI = x_nhwc.shape
    CO, CIw, KH, KW = w_oihw.shape
    assert CI == CIw
    patches, OH, OW = _im2col(x_nhwc, KH, KW, stride, padding)
    M, Kd = B * OH * OW, KH * KW * CI
    lhs = patches.reshape(M, Kd)

    # (CO, CI, KH, KW) -> (KH*KW*CI, CO), matching the (ky, kx, ci) patch order.
    w_mat = jnp.transpose(w_oihw, (2, 3, 1, 0)).reshape(Kd, CO)
    b_vec = bias if bias is not None else jnp.zeros((CO,), dtype=x_nhwc.dtype)

    # Lane-dense output: pad narrow C_out (1 / c_dim) up to 128 lanes so the
    # final store is an unmasked full-width vst; sliced back below.
    N = CO
    if pad_cout_to is not None and CO < pad_cout_to:
        N = pad_cout_to
        w_mat = jnp.pad(w_mat, ((0, 0), (0, N - CO)))
        b_vec = jnp.pad(b_vec, (0, N - CO))
    b_row = b_vec.reshape(1, N).astype(jnp.float32)

    # TODO(synk): for HBM-bound deployments cast lhs / w_mat to bfloat16 here
    # (the kernel already accumulates in f32); kept f32 for exact parity.
    out = _matmul_bias_act(lhs, w_mat, b_row, apply_leaky=leaky)
    return out.reshape(B, OH, OW, N)[..., :CO]


# ---------------------------------------------------------------------------
# Discriminator forward (matches the PyTorch module semantics).
# ---------------------------------------------------------------------------
def discriminator_forward(x_nchw, params):
    """x: (B, 3, H, W) f32 -> (out_src (B,1,H/2^R,W/2^R), out_cls (B, c_dim))."""
    h = jnp.transpose(x_nchw, (0, 2, 3, 1))           # NCHW -> NHWC (layout only)
    for w, b in params["main"]:
        h = conv2d_pallas(h, w, b, stride=2, padding=1, leaky=True)
    out_src = conv2d_pallas(h, params["conv1_w"], None,
                            stride=1, padding=1, leaky=False, pad_cout_to=128)
    out_cls = conv2d_pallas(h, params["conv2_w"], None,
                            stride=1, padding=0, leaky=False, pad_cout_to=128)
    out_src = jnp.transpose(out_src, (0, 3, 1, 2))    # back to NCHW
    out_cls = out_cls.reshape(out_cls.shape[0], -1)   # (B,1,1,c_dim) -> (B,c_dim)
    return out_src, out_cls


def init_discriminator_params(key, image_size, conv_dim, c_dim, repeat_num):
    params = {"main": []}
    cin, cout = 3, conv_dim
    for _ in range(repeat_num):
        key, kw, kb = jax.random.split(key, 3)
        fan_in = cin * 4 * 4
        w = jax.random.normal(kw, (cout, cin, 4, 4), jnp.float32) / jnp.sqrt(fan_in)
        b = 0.05 * jax.random.normal(kb, (cout,), jnp.float32)
        params["main"].append((w, b))
        cin, cout = cout, cout * 2
    curr_dim = cin
    kz = image_size // (2 ** repeat_num)
    key, k1, k2 = jax.random.split(key, 3)
    params["conv1_w"] = jax.random.normal(
        k1, (1, curr_dim, 3, 3), jnp.float32) / jnp.sqrt(curr_dim * 9)
    params["conv2_w"] = jax.random.normal(
        k2, (c_dim, curr_dim, kz, kz), jnp.float32) / jnp.sqrt(curr_dim * kz * kz)
    return params


# ---------------------------------------------------------------------------
# Pure-JAX reference (lax convs), mirrors the PyTorch forward exactly.
# ---------------------------------------------------------------------------
def _conv2d_ref(x_nchw, w_oihw, bias, *, stride, padding):
    y = jax.lax.conv_general_dilated(
        x_nchw, w_oihw,
        window_strides=(stride, stride),
        padding=((padding, padding), (padding, padding)),
        dimension_numbers=("NCHW", "OIHW", "NCHW"))
    if bias is not None:
        y = y + bias.reshape(1, -1, 1, 1)
    return y


def _reference_forward(x_nchw, params):
    h = x_nchw
    for w, b in params["main"]:
        h = _conv2d_ref(h, w, b, stride=2, padding=1)
        h = jnp.where(h > 0, h, NEG_SLOPE * h)
    out_src = _conv2d_ref(h, params["conv1_w"], None, stride=1, padding=1)
    out_cls = _conv2d_ref(h, params["conv2_w"], None, stride=1, padding=0)
    return out_src, out_cls.reshape(out_cls.shape[0], out_cls.shape[1])


if __name__ == "__main__":
    key = jax.random.PRNGKey(0)
    # Small configuration consistent with the module's structure:
    # image_size=16, conv_dim=8, c_dim=5, repeat_num=3 -> final 2x2 feature map.
    B, image_size, conv_dim, c_dim, repeat_num = 2, 16, 8, 5, 3

    key, kx, kp = jax.random.split(key, 3)
    x = jax.random.normal(kx, (B, 3, image_size, image_size), dtype=jnp.float32)
    params = init_discriminator_params(kp, image_size, conv_dim, c_dim, repeat_num)

    fwd = jax.jit(discriminator_forward)
    out_src, out_cls = jax.block_until_ready(fwd(x, params))

    ref_src, ref_cls = _reference_forward(x, params)
    s = image_size // (2 ** repeat_num)
    assert out_src.shape == (B, 1, s, s)
    assert out_cls.shape == (B, c_dim)
    assert jnp.allclose(out_src, ref_src, atol=1e-3, rtol=1e-3)
    assert jnp.allclose(out_cls, ref_cls, atol=1e-3, rtol=1e-3)

    print("KERNEL_OK")
</pallas_src>

<mosaic_0001>
module attributes {stable_mosaic.version = 11 : i64} {
  func.func @_gemm_epilogue_kernel(%arg0: i32, %arg1: i32, %arg2: memref<128x48xf32, #tpu.memory_space<vmem>>, %arg3: memref<48x8xf32, #tpu.memory_space<vmem>>, %arg4: memref<1x8xf32, #tpu.memory_space<vmem>>, %arg5: memref<128x8xf32, #tpu.memory_space<vmem>>, %arg6: memref<128x8xf32, #tpu.memory_space<vmem>>) attributes {dimension_semantics = [#tpu.dimension_semantics<parallel>, #tpu.dimension_semantics<arbitrary>], iteration_bounds = array<i64: 1, 1>, scalar_prefetch = 0 : i64, scratch_operands = 1 : i64, tpu.core_type = #tpu.core_type<tc>, window_params = [{transform_indices = @transform_0, window_bounds = array<i64: 128, 48>}, {transform_indices = @transform_1, window_bounds = array<i64: 48, 8>}, {pipeline_mode = #tpu.pipeline_mode<synchronous>, transform_indices = @transform_2, window_bounds = array<i64: 1, 8>}, {transform_indices = @transform_3, window_bounds = array<i64: 128, 8>}]} {
    %c0_i32 = arith.constant 0 : i32
    %0 = arith.cmpi eq, %arg1, %c0_i32 : i32
    %1 = arith.extui %0 : i1 to i32
    %c0_i32_0 = arith.constant 0 : i32
    %2 = arith.cmpi ne, %1, %c0_i32_0 : i32
    scf.if %2 {
      %cst_10 = arith.constant 0.000000e+00 : f32
      %12 = vector.broadcast %cst_10 : f32 to vector<128x8xf32>
      %c0_11 = arith.constant 0 : index
      %c0_12 = arith.constant 0 : index
      %13 = vector.load %arg6[%c0_11, %c0_12] : memref<128x8xf32, #tpu.memory_space<vmem>>, vector<128x8xf32>
      tpu.vector_store %arg6[%c0_11, %c0_12], %12 {strides = array<i32>} : memref<128x8xf32, #tpu.memory_space<vmem>>, vector<128x8xf32>,
    } else {
    }
    %c0 = arith.constant 0 : index
    %c0_1 = arith.constant 0 : index
    %3 = vector.load %arg6[%c0, %c0_1] : memref<128x8xf32, #tpu.memory_space<vmem>>, vector<128x8xf32>
    %c0_2 = arith.constant 0 : index
    %c0_3 = arith.constant 0 : index
    %4 = vector.load %arg2[%c0_2, %c0_3] : memref<128x48xf32, #tpu.memory_space<vmem>>, vector<128x48xf32>
    %c0_4 = arith.constant 0 : index
    %c0_5 = arith.constant 0 : index
    %5 = vector.load %arg3[%c0_4, %c0_5] : memref<48x8xf32, #tpu.memory_space<vmem>>, vector<48x8xf32>
    %cst = arith.constant dense<0.000000e+00> : vector<128x8xf32>
    %6 = tpu.matmul %4, %5, %cst {dimension_numbers = #tpu.dot_dimension_numbers<[1], [0], [0], [1], [0, 0, 1, 1], [], []>} : vector<128x48xf32>, vector<48x8xf32>, vector<128x8xf32> -> vector<128x8xf32>
    %7 = arith.addf %3, %6 : vector<128x8xf32>
    %c0_6 = arith.constant 0 : index
    %c0_7 = arith.constant 0 : index
    %8 = vector.load %arg6[%c0_6, %c0_7] : memref<128x8xf32, #tpu.memory_space<vmem>>, vector<128x8xf32>
    tpu.vector_store %arg6[%c0_6, %c0_7], %7 {strides = array<i32>} : memref<128x8xf32, #tpu.memory_space<vmem>>, vector<128x8xf32>,
    %c0_i32_8 = arith.constant 0 : i32
    %9 = arith.cmpi eq, %arg1, %c0_i32_8 : i32
    %10 = arith.extui %9 : i1 to i32
    %c0_i32_9 = arith.constant 0 : i32
    %11 = arith.cmpi ne, %10, %c0_i32_9 : i32
    scf.if %11 {
      %c0_10 = arith.constant 0 : index
      %c0_11 = arith.constant 0 : index
      %12 = vector.load %arg6[%c0_10, %c0_11] : memref<128x8xf32, #tpu.memory_space<vmem>>, vector<128x8xf32>
      %c0_12 = arith.constant 0 : index
      %c0_13 = arith.constant 0 : index
      %13 = vector.load %arg4[%c0_12, %c0_13] : memref<1x8xf32, #tpu.memory_space<vmem>>, vector<1x8xf32>
      %14 = vector.broadcast %13 : vector<1x8xf32> to vector<128x8xf32>
      %15 = arith.addf %12, %14 : vector<128x8xf32>
      %cst_14 = arith.constant 0.000000e+00 : f32
      %16 = vector.broadcast %cst_14 : f32 to vector<128x8xf32>
      %17 = arith.cmpf ogt, %15, %16 : vector<128x8xf32>
      %cst_15 = arith.constant 0.00999999977 : f32
      %18 = vector.broadcast %cst_15 : f32 to vector<128x8xf32>
      %19 = arith.mulf %18, %15 : vector<128x8xf32>
      %20 = arith.select %17, %15, %19 : vector<128x8xi1>, vector<128x8xf32>
      %c0_16 = arith.constant 0 : index
      %c0_17 = arith.constant 0 : index
      %21 = vector.load %arg5[%c0_16, %c0_17] : memref<128x8xf32, #tpu.memory_space<vmem>>, vector<128x8xf32>
      tpu.vector_store %arg5[%c0_16, %c0_17], %20 {strides = array<i32>} : memref<128x8xf32, #tpu.memory_space<vmem>>, vector<128x8xf32>,
    } else {
    }
    return
  }
  func.func @transform_0(%arg0: i32, %arg1: i32) -> (i32, i32) {
    %c0_i32 = arith.constant 0 : i32
    return %arg0, %arg1 : i32, i32
  }
  func.func @transform_1(%arg0: i32, %arg1: i32) -> (i32, i32) {
    %c0_i32 = arith.constant 0 : i32
    %c0_i32_0 = arith.constant 0 : i32
    return %arg1, %c0_i32 : i32, i32
  }
  func.func @transform_2(%arg0: i32, %arg1: i32) -> (i32, i32) {
    %c0_i32 = arith.constant 0 : i32
    %c0_i32_0 = arith.constant 0 : i32
    %c0_i32_1 = arith.constant 0 : i32
    return %c0_i32, %c0_i32_0 : i32, i32
  }
  func.func @transform_3(%arg0: i32, %arg1: i32) -> (i32, i32) {
    %c0_i32 = arith.constant 0 : i32
    %c0_i32_0 = arith.constant 0 : i32
    return %arg0, %c0_i32 : i32, i32
  }
}

module attributes {stable_mosaic.version = 11 : i64} {
  func.func @_gemm_epilogue_kernel(%arg0: i32, %arg1: i32, %arg2: memref<32x128xf32, #tpu.memory_space<vmem>>, %arg3: memref<128x16xf32, #tpu.memory_space<vmem>>, %arg4: memref<1x16xf32, #tpu.memory_space<vmem>>, %arg5: memref<32x16xf32, #tpu.memory_space<vmem>>, %arg6: memref<32x16xf32, #tpu.memory_space<vmem>>) attributes {dimension_semantics = [#tpu.dimension_semantics<parallel>, #tpu.dimension_semantics<arbitrary>], iteration_bounds = array<i64: 1, 1>, scalar_prefetch = 0 : i64, scratch_operands = 1 : i64, tpu.core_type = #tpu.core_type<tc>, window_params = [{transform_indices = @transform_0, window_bounds = array<i64: 32, 128>}, {transform_indices = @transform_1, window_bounds = array<i64: 128, 16>}, {pipeline_mode = #tpu.pipeline_mode<synchronous>, transform_indices = @transform_2, window_bounds = array<i64: 1, 16>}, {transform_indices = @transform_3, window_bounds = array<i64: 32, 16>}]} {
    %c0_i32 = arith.constant 0 : i32
    %0 = arith.cmpi eq, %arg1, %c0_i32 : i32
    %1 = arith.extui %0 : i1 to i32
    %c0_i32_0 = arith.constant 0 : i32
    %2 = arith.cmpi ne, %1, %c0_i32_0 : i32
    scf.if %2 {
      %cst_10 = arith.constant 0.000000e+00 : f32
      %12 = vector.broadcast %cst_10 : f32 to vector<32x16xf32>
      %c0_11 = arith.constant 0 : index
      %c0_12 = arith.constant 0 : index
      %13 = vector.load %arg6[%c0_11, %c0_12] : memref<32x16xf32, #tpu.memory_space<vmem>>, vector<32x16xf32>
      tpu.vector_store %arg6[%c0_11, %c0_12], %12 {strides = array<i32>} : memref<32x16xf32, #tpu.memory_space<vmem>>, vector<32x16xf32>,
    } else {
    }
    %c0 = arith.constant 0 : index
    %c0_1 = arith.constant 0 : index
    %3 = vector.load %arg6[%c0, %c0_1] : memref<32x16xf32, #tpu.memory_space<vmem>>, vector<32x16xf32>
    %c0_2 = arith.constant 0 : index
    %c0_3 = arith.constant 0 : index
    %4 = vector.load %arg2[%c0_2, %c0_3] : memref<32x128xf32, #tpu.memory_space<vmem>>, vector<32x128xf32>
    %c0_4 = arith.constant 0 : index
    %c0_5 = arith.constant 0 : index
    %5 = vector.load %arg3[%c0_4, %c0_5] : memref<128x16xf32, #tpu.memory_space<vmem>>, vector<128x16xf32>
    %cst = arith.constant dense<0.000000e+00> : vector<32x16xf32>
    %6 = tpu.matmul %4, %5, %cst {dimension_numbers = #tpu.dot_dimension_numbers<[1], [0], [0], [1], [0, 0, 1, 1], [], []>} : vector<32x128xf32>, vector<128x16xf32>, vector<32x16xf32> -> vector<32x16xf32>
    %7 = arith.addf %3, %6 : vector<32x16xf32>
    %c0_6 = arith.constant 0 : index
    %c0_7 = arith.constant 0 : index
    %8 = vector.load %arg6[%c0_6, %c0_7] : memref<32x16xf32, #tpu.memory_space<vmem>>, vector<32x16xf32>
    tpu.vector_store %arg6[%c0_6, %c0_7], %7 {strides = array<i32>} : memref<32x16xf32, #tpu.memory_space<vmem>>, vector<32x16xf32>,
    %c0_i32_8 = arith.constant 0 : i32
    %9 = arith.cmpi eq, %arg1, %c0_i32_8 : i32
    %10 = arith.extui %9 : i1 to i32
    %c0_i32_9 = arith.constant 0 : i32
    %11 = arith.cmpi ne, %10, %c0_i32_9 : i32
    scf.if %11 {
      %c0_10 = arith.constant 0 : index
      %c0_11 = arith.constant 0 : index
      %12 = vector.load %arg6[%c0_10, %c0_11] : memref<32x16xf32, #tpu.memory_space<vmem>>, vector<32x16xf32>
      %c0_12 = arith.constant 0 : index
      %c0_13 = arith.constant 0 : index
      %13 = vector.load %arg4[%c0_12, %c0_13] : memref<1x16xf32, #tpu.memory_space<vmem>>, vector<1x16xf32>
      %14 = vector.broadcast %13 : vector<1x16xf32> to vector<32x16xf32>
      %15 = arith.addf %12, %14 : vector<32x16xf32>
      %cst_14 = arith.constant 0.000000e+00 : f32
      %16 = vector.broadcast %cst_14 : f32 to vector<32x16xf32>
      %17 = arith.cmpf ogt, %15, %16 : vector<32x16xf32>
      %cst_15 = arith.constant 0.00999999977 : f32
      %18 = vector.broadcast %cst_15 : f32 to vector<32x16xf32>
      %19 = arith.mulf %18, %15 : vector<32x16xf32>
      %20 = arith.select %17, %15, %19 : vector<32x16xi1>, vector<32x16xf32>
      %c0_16 = arith.constant 0 : index
      %c0_17 = arith.constant 0 : index
      %21 = vector.load %arg5[%c0_16, %c0_17] : memref<32x16xf32, #tpu.memory_space<vmem>>, vector<32x16xf32>
      tpu.vector_store %arg5[%c0_16, %c0_17], %20 {strides = array<i32>} : memref<32x16xf32, #tpu.memory_space<vmem>>, vector<32x16xf32>,
    } else {
    }
    return
  }
  func.func @transform_0(%arg0: i32, %arg1: i32) -> (i32, i32) {
    %c0_i32 = arith.constant 0 : i32
    return %arg0, %arg1 : i32, i32
  }
  func.func @transform_1(%arg0: i32, %arg1: i32) -> (i32, i32) {
    %c0_i32 = arith.constant 0 : i32
    %c0_i32_0 = arith.constant 0 : i32
    return %arg1, %c0_i32 : i32, i32
  }
  func.func @transform_2(%arg0: i32, %arg1: i32) -> (i32, i32) {
    %c0_i32 = arith.constant 0 : i32
    %c0_i32_0 = arith.constant 0 : i32
    %c0_i32_1 = arith.constant 0 : i32
    return %c0_i32, %c0_i32_0 : i32, i32
  }
  func.func @transform_3(%arg0: i32, %arg1: i32) -> (i32, i32) {
    %c0_i32 = arith.constant 0 : i32
    %c0_i32_0 = arith.constant 0 : i32
    return %arg0, %c0_i32 : i32, i32
  }
}

module attributes {stable_mosaic.version = 11 : i64} {
  func.func @_gemm_epilogue_kernel(%arg0: i32, %arg1: i32, %arg2: memref<8x256xf32, #tpu.memory_space<vmem>>, %arg3: memref<256x32xf32, #tpu.memory_space<vmem>>, %arg4: memref<1x32xf32, #tpu.memory_space<vmem>>, %arg5: memref<8x32xf32, #tpu.memory_space<vmem>>, %arg6: memref<8x32xf32, #tpu.memory_space<vmem>>) attributes {dimension_semantics = [#tpu.dimension_semantics<parallel>, #tpu.dimension_semantics<arbitrary>], iteration_bounds = array<i64: 1, 1>, scalar_prefetch = 0 : i64, scratch_operands = 1 : i64, tpu.core_type = #tpu.core_type<tc>, window_params = [{transform_indices = @transform_0, window_bounds = array<i64: 8, 256>}, {transform_indices = @transform_1, window_bounds = array<i64: 256, 32>}, {pipeline_mode = #tpu.pipeline_mode<synchronous>, transform_indices = @transform_2, window_bounds = array<i64: 1, 32>}, {transform_indices = @transform_3, window_bounds = array<i64: 8, 32>}]} {
    %c0_i32 = arith.constant 0 : i32
    %0 = arith.cmpi eq, %arg1, %c0_i32 : i32
    %1 = arith.extui %0 : i1 to i32
    %c0_i32_0 = arith.constant 0 : i32
    %2 = arith.cmpi ne, %1, %c0_i32_0 : i32
    scf.if %2 {
      %cst_10 = arith.constant 0.000000e+00 : f32
      %12 = vector.broadcast %cst_10 : f32 to vector<8x32xf32>
      %c0_11 = arith.constant 0 : index
      %c0_12 = arith.constant 0 : index
      %13 = vector.load %arg6[%c0_11, %c0_12] : memref<8x32xf32, #tpu.memory_space<vmem>>, vector<8x32xf32>
      tpu.vector_store %arg6[%c0_11, %c0_12], %12 {strides = array<i32>} : memref<8x32xf32, #tpu.memory_space<vmem>>, vector<8x32xf32>,
    } else {
    }
    %c0 = arith.constant 0 : index
    %c0_1 = arith.constant 0 : index
    %3 = vector.load %arg6[%c0, %c0_1] : memref<8x32xf32, #tpu.memory_space<vmem>>, vector<8x32xf32>
    %c0_2 = arith.constant 0 : index
    %c0_3 = arith.constant 0 : index
    %4 = vector.load %arg2[%c0_2, %c0_3] : memref<8x256xf32, #tpu.memory_space<vmem>>, vector<8x256xf32>
    %c0_4 = arith.constant 0 : index
    %c0_5 = arith.constant 0 : index
    %5 = vector.load %arg3[%c0_4, %c0_5] : memref<256x32xf32, #tpu.memory_space<vmem>>, vector<256x32xf32>
    %cst = arith.constant dense<0.000000e+00> : vector<8x32xf32>
    %6 = tpu.matmul %4, %5, %cst {dimension_numbers = #tpu.dot_dimension_numbers<[1], [0], [0], [1], [0, 0, 1, 1], [], []>} : vector<8x256xf32>, vector<256x32xf32>, vector<8x32xf32> -> vector<8x32xf32>
    %7 = arith.addf %3, %6 : vector<8x32xf32>
    %c0_6 = arith.constant 0 : index
    %c0_7 = arith.constant 0 : index
    %8 = vector.load %arg6[%c0_6, %c0_7] : memref<8x32xf32, #tpu.memory_space<vmem>>, vector<8x32xf32>
    tpu.vector_store %arg6[%c0_6, %c0_7], %7 {strides = array<i32>} : memref<8x32xf32, #tpu.memory_space<vmem>>, vector<8x32xf32>,
    %c0_i32_8 = arith.constant 0 : i32
    %9 = arith.cmpi eq, %arg1, %c0_i32_8 : i32
    %10 = arith.extui %9 : i1 to i32
    %c0_i32_9 = arith.constant 0 : i32
    %11 = arith.cmpi ne, %10, %c0_i32_9 : i32
    scf.if %11 {
      %c0_10 = arith.constant 0 : index
      %c0_11 = arith.constant 0 : index
      %12 = vector.load %arg6[%c0_10, %c0_11] : memref<8x32xf32, #tpu.memory_space<vmem>>, vector<8x32xf32>
      %c0_12 = arith.constant 0 : index
      %c0_13 = arith.constant 0 : index
      %13 = vector.load %arg4[%c0_12, %c0_13] : memref<1x32xf32, #tpu.memory_space<vmem>>, vector<1x32xf32>
      %14 = vector.broadcast %13 : vector<1x32xf32> to vector<8x32xf32>
      %15 = arith.addf %12, %14 : vector<8x32xf32>
      %cst_14 = arith.constant 0.000000e+00 : f32
      %16 = vector.broadcast %cst_14 : f32 to vector<8x32xf32>
      %17 = arith.cmpf ogt, %15, %16 : vector<8x32xf32>
      %cst_15 = arith.constant 0.00999999977 : f32
      %18 = vector.broadcast %cst_15 : f32 to vector<8x32xf32>
      %19 = arith.mulf %18, %15 : vector<8x32xf32>
      %20 = arith.select %17, %15, %19 : vector<8x32xi1>, vector<8x32xf32>
      %c0_16 = arith.constant 0 : index
      %c0_17 = arith.constant 0 : index
      %21 = vector.load %arg5[%c0_16, %c0_17] : memref<8x32xf32, #tpu.memory_space<vmem>>, vector<8x32xf32>
      tpu.vector_store %arg5[%c0_16, %c0_17], %20 {strides = array<i32>} : memref<8x32xf32, #tpu.memory_space<vmem>>, vector<8x32xf32>,
    } else {
    }
    return
  }
  func.func @transform_0(%arg0: i32, %arg1: i32) -> (i32, i32) {
    %c0_i32 = arith.constant 0 : i32
    return %arg0, %arg1 : i32, i32
  }
  func.func @transform_1(%arg0: i32, %arg1: i32) -> (i32, i32) {
    %c0_i32 = arith.constant 0 : i32
    %c0_i32_0 = arith.constant 0 : i32
    return %arg1, %c0_i32 : i32, i32
  }
  func.func @transform_2(%arg0: i32, %arg1: i32) -> (i32, i32) {
    %c0_i32 = arith.constant 0 : i32
    %c0_i32_0 = arith.constant 0 : i32
    %c0_i32_1 = arith.constant 0 : i32
    return %c0_i32, %c0_i32_0 : i32, i32
  }
  func.func @transform_3(%arg0: i32, %arg1: i32) -> (i32, i32) {
    %c0_i32 = arith.constant 0 : i32
    %c0_i32_0 = arith.constant 0 : i32
    return %arg0, %c0_i32 : i32, i32
  }
}

module attributes {stable_mosaic.version = 11 : i64} {
  func.func @_gemm_epilogue_kernel(%arg0: i32, %arg1: i32, %arg2: memref<2x128xf32, #tpu.memory_space<vmem>>, %arg3: memref<128x128xf32, #tpu.memory_space<vmem>>, %arg4: memref<1x128xf32, #tpu.memory_space<vmem>>, %arg5: memref<2x128xf32, #tpu.memory_space<vmem>>, %arg6: memref<2x128xf32, #tpu.memory_space<vmem>>) attributes {dimension_semantics = [#tpu.dimension_semantics<parallel>, #tpu.dimension_semantics<arbitrary>], iteration_bounds = array<i64: 1, 1>, scalar_prefetch = 0 : i64, scratch_operands = 1 : i64, tpu.core_type = #tpu.core_type<tc>, window_params = [{transform_indices = @transform_0, window_bounds = array<i64: 2, 128>}, {transform_indices = @transform_1, window_bounds = array<i64: 128, 128>}, {pipeline_mode = #tpu.pipeline_mode<synchronous>, transform_indices = @transform_2, window_bounds = array<i64: 1, 128>}, {transform_indices = @transform_3, window_bounds = array<i64: 2, 128>}]} {
    %c0_i32 = arith.constant 0 : i32
    %0 = arith.cmpi eq, %arg1, %c0_i32 : i32
    %1 = arith.extui %0 : i1 to i32
    %c0_i32_0 = arith.constant 0 : i32
    %2 = arith.cmpi ne, %1, %c0_i32_0 : i32
    scf.if %2 {
      %cst_10 = arith.constant 0.000000e+00 : f32
      %12 = vector.broadcast %cst_10 : f32 to vector<2x128xf32>
      %c0_11 = arith.constant 0 : index
      %c0_12 = arith.constant 0 : index
      %13 = vector.load %arg6[%c0_11, %c0_12] : memref<2x128xf32, #tpu.memory_space<vmem>>, vector<2x128xf32>
      tpu.vector_store %arg6[%c0_11, %c0_12], %12 {strides = array<i32>} : memref<2x128xf32, #tpu.memory_space<vmem>>, vector<2x128xf32>,
    } else {
    }
    %c0 = arith.constant 0 : index
    %c0_1 = arith.constant 0 : index
    %3 = vector.load %arg6[%c0, %c0_1] : memref<2x128xf32, #tpu.memory_space<vmem>>, vector<2x128xf32>
    %c0_2 = arith.constant 0 : index
    %c0_3 = arith.constant 0 : index
    %4 = vector.load %arg2[%c0_2, %c0_3] : memref<2x128xf32, #tpu.memory_space<vmem>>, vector<2x128xf32>
    %c0_4 = arith.constant 0 : index
    %c0_5 = arith.constant 0 : index
    %5 = vector.load %arg3[%c0_4, %c0_5] : memref<128x128xf32, #tpu.memory_space<vmem>>, vector<128x128xf32>
    %cst = arith.constant dense<0.000000e+00> : vector<2x128xf32>
    %6 = tpu.matmul %4, %5, %cst {dimension_numbers = #tpu.dot_dimension_numbers<[1], [0], [0], [1], [0, 0, 1, 1], [], []>} : vector<2x128xf32>, vector<128x128xf32>, vector<2x128xf32> -> vector<2x128xf32>
    %7 = arith.addf %3, %6 : vector<2x128xf32>
    %c0_6 = arith.constant 0 : index
    %c0_7 = arith.constant 0 : index
    %8 = vector.load %arg6[%c0_6, %c0_7] : memref<2x128xf32, #tpu.memory_space<vmem>>, vector<2x128xf32>
    tpu.vector_store %arg6[%c0_6, %c0_7], %7 {strides = array<i32>} : memref<2x128xf32, #tpu.memory_space<vmem>>, vector<2x128xf32>,
    %c0_i32_8 = arith.constant 0 : i32
    %9 = arith.cmpi eq, %arg1, %c0_i32_8 : i32
    %10 = arith.extui %9 : i1 to i32
    %c0_i32_9 = arith.constant 0 : i32
    %11 = arith.cmpi ne, %10, %c0_i32_9 : i32
    scf.if %11 {
      %c0_10 = arith.constant 0 : index
      %c0_11 = arith.constant 0 : index
      %12 = vector.load %arg6[%c0_10, %c0_11] : memref<2x128xf32, #tpu.memory_space<vmem>>, vector<2x128xf32>
      %c0_12 = arith.constant 0 : index
      %c0_13 = arith.constant 0 : index
      %13 = vector.load %arg4[%c0_12, %c0_13] : memref<1x128xf32, #tpu.memory_space<vmem>>, vector<1x128xf32>
      %14 = vector.broadcast %13 : vector<1x128xf32> to vector<2x128xf32>
      %15 = arith.addf %12, %14 : vector<2x128xf32>
      %c0_14 = arith.constant 0 : index
      %c0_15 = arith.constant 0 : index
      %16 = vector.load %arg5[%c0_14, %c0_15] : memref<2x128xf32, #tpu.memory_space<vmem>>, vector<2x128xf32>
      tpu.vector_store %arg5[%c0_14, %c0_15], %15 {strides = array<i32>} : memref<2x128xf32, #tpu.memory_space<vmem>>, vector<2x128xf32>,
    } else {
    }
    return
  }
  func.func @transform_0(%arg0: i32, %arg1: i32) -> (i32, i32) {
    %c0_i32 = arith.constant 0 : i32
    return %arg0, %arg1 : i32, i32
  }
  func.func @transform_1(%arg0: i32, %arg1: i32) -> (i32, i32) {
    %c0_i32 = arith.constant 0 : i32
    %c0_i32_0 = arith.constant 0 : i32
    return %arg1, %c0_i32 : i32, i32
  }
  func.func @transform_2(%arg0: i32, %arg1: i32) -> (i32, i32) {
    %c0_i32 = arith.constant 0 : i32
    %c0_i32_0 = arith.constant 0 : i32
    %c0_i32_1 = arith.constant 0 : i32
    return %c0_i32, %c0_i32_0 : i32, i32
  }
  func.func @transform_3(%arg0: i32, %arg1: i32) -> (i32, i32) {
    %c0_i32 = arith.constant 0 : i32
    %c0_i32_0 = arith.constant 0 : i32
    return %arg0, %c0_i32 : i32, i32
  }
}

module attributes {stable_mosaic.version = 11 : i64} {
  func.func @_gemm_epilogue_kernel(%arg0: i32, %arg1: i32, %arg2: memref<8x288xf32, #tpu.memory_space<vmem>>, %arg3: memref<288x128xf32, #tpu.memory_space<vmem>>, %arg4: memref<1x128xf32, #tpu.memory_space<vmem>>, %arg5: memref<8x128xf32, #tpu.memory_space<vmem>>, %arg6: memref<8x128xf32, #tpu.memory_space<vmem>>) attributes {dimension_semantics = [#tpu.dimension_semantics<parallel>, #tpu.dimension_semantics<arbitrary>], iteration_bounds = array<i64: 1, 1>, scalar_prefetch = 0 : i64, scratch_operands = 1 : i64, tpu.core_type = #tpu.core_type<tc>, window_params = [{transform_indices = @transform_0, window_bounds = array<i64: 8, 288>}, {transform_indices = @transform_1, window_bounds = array<i64: 288, 128>}, {pipeline_mode = #tpu.pipeline_mode<synchronous>, transform_indices = @transform_2, window_bounds = array<i64: 1, 128>}, {transform_indices = @transform_3, window_bounds = array<i64: 8, 128>}]} {
    %c0_i32 = arith.constant 0 : i32
    %0 = arith.cmpi eq, %arg1, %c0_i32 : i32
    %1 = arith.extui %0 : i1 to i32
    %c0_i32_0 = arith.constant 0 : i32
    %2 = arith.cmpi ne, %1, %c0_i32_0 : i32
    scf.if %2 {
      %cst_10 = arith.constant 0.000000e+00 : f32
      %12 = vector.broadcast %cst_10 : f32 to vector<8x128xf32>
      %c0_11 = arith.constant 0 : index
      %c0_12 = arith.constant 0 : index
      %13 = vector.load %arg6[%c0_11, %c0_12] : memref<8x128xf32, #tpu.memory_space<vmem>>, vector<8x128xf32>
      tpu.vector_store %arg6[%c0_11, %c0_12], %12 {strides = array<i32>} : memref<8x128xf32, #tpu.memory_space<vmem>>, vector<8x128xf32>,
    } else {
    }
    %c0 = arith.constant 0 : index
    %c0_1 = arith.constant 0 : index
    %3 = vector.load %arg6[%c0, %c0_1] : memref<8x128xf32, #tpu.memory_space<vmem>>, vector<8x128xf32>
    %c0_2 = arith.constant 0 : index
    %c0_3 = arith.constant 0 : index
    %4 = vector.load %arg2[%c0_2, %c0_3] : memref<8x288xf32, #tpu.memory_space<vmem>>, vector<8x288xf32>
    %c0_4 = arith.constant 0 : index
    %c0_5 = arith.constant 0 : index
    %5 = vector.load %arg3[%c0_4, %c0_5] : memref<288x128xf32, #tpu.memory_space<vmem>>, vector<288x128xf32>
    %cst = arith.constant dense<0.000000e+00> : vector<8x128xf32>
    %6 = tpu.matmul %4, %5, %cst {dimension_numbers = #tpu.dot_dimension_numbers<[1], [0], [0], [1], [0, 0, 1, 1], [], []>} : vector<8x288xf32>, vector<288x128xf32>, vector<8x128xf32> -> vector<8x128xf32>
    %7 = arith.addf %3, %6 : vector<8x128xf32>
    %c0_6 = arith.constant 0 : index
    %c0_7 = arith.constant 0 : index
    %8 = vector.load %arg6[%c0_6, %c0_7] : memref<8x128xf32, #tpu.memory_space<vmem>>, vector<8x128xf32>
    tpu.vector_store %arg6[%c0_6, %c0_7], %7 {strides = array<i32>} : memref<8x128xf32, #tpu.memory_space<vmem>>, vector<8x128xf32>,
    %c0_i32_8 = arith.constant 0 : i32
    %9 = arith.cmpi eq, %arg1, %c0_i32_8 : i32
    %10 = arith.extui %9 : i1 to i32
    %c0_i32_9 = arith.constant 0 : i32
    %11 = arith.cmpi ne, %10, %c0_i32_9 : i32
    scf.if %11 {
      %c0_10 = arith.constant 0 : index
      %c0_11 = arith.constant 0 : index
      %12 = vector.load %arg6[%c0_10, %c0_11] : memref<8x128xf32, #tpu.memory_space<vmem>>, vector<8x128xf32>
      %c0_12 = arith.constant 0 : index
      %c0_13 = arith.constant 0 : index
      %13 = vector.load %arg4[%c0_12, %c0_13] : memref<1x128xf32, #tpu.memory_space<vmem>>, vector<1x128xf32>
      %14 = vector.broadcast %13 : vector<1x128xf32> to vector<8x128xf32>
      %15 = arith.addf %12, %14 : vector<8x128xf32>
      %c0_14 = arith.constant 0 : index
      %c0_15 = arith.constant 0 : index
      %16 = vector.load %arg5[%c0_14, %c0_15] : memref<8x128xf32, #tpu.memory_space<vmem>>, vector<8x128xf32>
      tpu.vector_store %arg5[%c0_14, %c0_15], %15 {strides = array<i32>} : memref<8x128xf32, #tpu.memory_space<vmem>>, vector<8x128xf32>,
    } else {
    }
    return
  }
  func.func @transform_0(%arg0: i32, %arg1: i32) -> (i32, i32) {
    %c0_i32 = arith.constant 0 : i32
    return %arg0, %arg1 : i32, i32
  }
  func.func @transform_1(%arg0: i32, %arg1: i32) -> (i32, i32) {
    %c0_i32 = arith.constant 0 : i32
    %c0_i32_0 = arith.constant 0 : i32
    return %arg1, %c0_i32 : i32, i32
  }
  func.func @transform_2(%arg0: i32, %arg1: i32) -> (i32, i32) {
    %c0_i32 = arith.constant 0 : i32
    %c0_i32_0 = arith.constant 0 : i32
    %c0_i32_1 = arith.constant 0 : i32
    return %c0_i32, %c0_i32_0 : i32, i32
  }
  func.func @transform_3(%arg0: i32, %arg1: i32) -> (i32, i32) {
    %c0_i32 = arith.constant 0 : i32
    %c0_i32_0 = arith.constant 0 : i32
    return %arg0, %c0_i32 : i32, i32
  }
}

</mosaic_0001>

<llo_original>
// kernel: discriminator_forward.5
$region0: #{discriminator_forward.5}
  #allocation0 [shape = 'u32[]', space=smem, size = 0x4, offset = 0x4, fixed_abs, tag = 'smem constant byte address 0x4 - core index']
  #allocation1 [shape = 'u32[144,128]{1,0:T(1,128)}', space=vmem, size = 0x12000, scoped, tag = 'internal scratch']
  #allocation2 [shape = 'f32[128,8]{1,0:T(8,128)}', space=vmem, size = 0x10000, scoped, tag = 'scratch operand']
  %s0 = inlined_call_operand.vmem [shape: f32[128,48], index: 0, kind: input, shape index: {}]
  %s1 = inlined_call_operand.vmem [shape: f32[48,8], index: 1, kind: input, shape index: {}]
  %s2 = inlined_call_operand.vmem [shape: f32[1,8], index: 2, kind: input, shape index: {}]
  %s3 = inlined_call_operand.vmem [shape: f32[128,8], index: 3, kind: output, shape index: {}]
  %s4 = sld [smem:[#allocation0]]
  $region30: #{discriminator_forward.5} parent=0
    _
  %s6 = ssub.s32 1, %s4
  %s7 = scalar_select 0, %s6, %s4
  // Predicated region
  $region2: #{discriminator_forward.5} parent=0 // pred_check
    _
  $region3: #{discriminator_forward.5} parent=0 // pred_check_branch
    %9 = sbr.rel (0) target = $region5
  $region4: #{discriminator_forward.5} parent=0 // pred_region
    _
  $region5: #{discriminator_forward.5} parent=0 // pred_fallthru
    _
  // Predicated region
  $region6: #{discriminator_forward.5} parent=0 // pred_check
    _
  $region7: #{discriminator_forward.5} parent=0 // pred_check_branch
    %11 = sbr.rel (0) target = $region9
  $region8: #{discriminator_forward.5} parent=0 // pred_region
    _
  $region9: #{discriminator_forward.5} parent=0 // pred_fallthru
    _
  // Predicated region
  $region10: #{discriminator_forward.5} parent=0 // pred_check
    _
  $region11: #{discriminator_forward.5} parent=0 // pred_check_branch
    %13 = sbr.rel (0) target = $region13
  $region12: #{discriminator_forward.5} parent=0 // pred_region
    _
  $region13: #{discriminator_forward.5} parent=0 // pred_fallthru
    _
  %p14 = scmp.eq.s32.totalorder 0, 0
  // Predicated region
  $region14: #{discriminator_forward.5} parent=0 // pred_check
    %p15 = pneg %p14
  $region15: #{discriminator_forward.5} parent=0 // pred_check_branch
    %17 = sbr.rel (%p15) target = $region17
  $region16: #{discriminator_forward.5} parent=0 // pred_region
    %vm18 = vcmask 64512
    %19 = vst.msk [vmem:[#allocation2] sm:$0xff] %vm18, 0.0
    %20 = vst.msk [vmem:[#allocation2 + $0x8] sm:$0xff] %vm18, 0.0
    %21 = vst.msk [vmem:[#allocation2 + $0x10] sm:$0xff] %vm18, 0.0
    %22 = vst.msk [vmem:[#allocation2 + $0x18] sm:$0xff] %vm18, 0.0
    %23 = vst.msk [vmem:[#allocation2 + $0x20] sm:$0xff] %vm18, 0.0
    %24 = vst.msk [vmem:[#allocation2 + $0x28] sm:$0xff] %vm18, 0.0
    %25 = vst.msk [vmem:[#allocation2 + $0x30] sm:$0xff] %vm18, 0.0
    %26 = vst.msk [vmem:[#allocation2 + $0x38] sm:$0xff] %vm18, 0.0
    %27 = vst.msk [vmem:[#allocation2 + $0x40] sm:$0xff] %vm18, 0.0
    %28 = vst.msk [vmem:[#allocation2 + $0x48] sm:$0xff] %vm18, 0.0
    %29 = vst.msk [vmem:[#allocation2 + $0x50] sm:$0xff] %vm18, 0.0
    %30 = vst.msk [vmem:[#allocation2 + $0x58] sm:$0xff] %vm18, 0.0
    %31 = vst.msk [vmem:[#allocation2 + $0x60] sm:$0xff] %vm18, 0.0
    %32 = vst.msk [vmem:[#allocation2 + $0x68] sm:$0xff] %vm18, 0.0
    %33 = vst.msk [vmem:[#allocation2 + $0x70] sm:$0xff] %vm18, 0.0
    %34 = vst.msk [vmem:[#allocation2 + $0x78] sm:$0xff] %vm18, 0.0
  $region17: #{discriminator_forward.5} parent=0 // pred_fallthru
    _
  %v35 = vld [vmem:[#allocation2] sm:$0xff]
  %v36 = vld [vmem:[#allocation2 + $0x8] sm:$0xff]
  %v37 = vld [vmem:[#allocation2 + $0x10] sm:$0xff]
  %v38 = vld [vmem:[#allocation2 + $0x18] sm:$0xff]
  %v39 = vld [vmem:[#allocation2 + $0x20] sm:$0xff]
  %v40 = vld [vmem:[#allocation2 + $0x28] sm:$0xff]
  %v41 = vld [vmem:[#allocation2 + $0x30] sm:$0xff]
  %v42 = vld [vmem:[#allocation2 + $0x38] sm:$0xff]
  %v43 = vld [vmem:[#allocation2 + $0x40] sm:$0xff]
  %v44 = vld [vmem:[#allocation2 + $0x48] sm:$0xff]
  %v45 = vld [vmem:[#allocation2 + $0x50] sm:$0xff]
  %v46 = vld [vmem:[#allocation2 + $0x58] sm:$0xff]
  %v47 = vld [vmem:[#allocation2 + $0x60] sm:$0xff]
  %v48 = vld [vmem:[#allocation2 + $0x68] sm:$0xff]
  %v49 = vld [vmem:[#allocation2 + $0x70] sm:$0xff]
  %v50 = vld [vmem:[#allocation2 + $0x78] sm:$0xff]
  %v51 = vld [vmem:[%s0] sm:$0xff]
  %v52 = vld [vmem:[%s0 + $0x8] sm:$0xff]
  %v53 = vld [vmem:[%s0 + $0x10] sm:$0xff]
  %v54 = vld [vmem:[%s0 + $0x18] sm:$0xff]
  %v55 = vld [vmem:[%s0 + $0x20] sm:$0xff]
  %v56 = vld [vmem:[%s0 + $0x28] sm:$0xff]
  %v57 = vld [vmem:[%s0 + $0x30] sm:$0xff]
  %v58 = vld [vmem:[%s0 + $0x38] sm:$0xff]
  %v59 = vld [vmem:[%s0 + $0x40] sm:$0xff]
  %v60 = vld [vmem:[%s0 + $0x48] sm:$0xff]
  %v61 = vld [vmem:[%s0 + $0x50] sm:$0xff]
  %v62 = vld [vmem:[%s0 + $0x58] sm:$0xff]
  %v63 = vld [vmem:[%s0 + $0x60] sm:$0xff]
  %v64 = vld [vmem:[%s0 + $0x68] sm:$0xff]
  %v65 = vld [vmem:[%s0 + $0x70] sm:$0xff]
  %v66 = vld [vmem:[%s0 + $0x78] sm:$0xff]
  %v67 = vld [vmem:[%s1] sm:$0xff]
  %v68 = vld [vmem:[%s1 + $0x8] sm:$0xff]
  %v69 = vld [vmem:[%s1 + $0x10] sm:$0xff]
  %v70 = vld [vmem:[%s1 + $0x18] sm:$0xff]
  %v71 = vld [vmem:[%s1 + $0x20] sm:$0xff]
  %v72 = vld [vmem:[%s1 + $0x28] sm:$0xff]
  %vm73 = vcmask 392192
  %v75 = vsel %vm73, %v51, 0
  %v78 = vsel %vm73, %v52, 0
  %v81 = vsel %vm73, %v53, 0
  %v84 = vsel %vm73, %v54, 0
  %v87 = vsel %vm73, %v55, 0
  %v90 = vsel %vm73, %v56, 0
  %v93 = vsel %vm73, %v57, 0
  %v96 = vsel %vm73, %v58, 0
  %v99 = vsel %vm73, %v59, 0
  %v102 = vsel %vm73, %v60, 0
  %v105 = vsel %vm73, %v61, 0
  %v108 = vsel %vm73, %v62, 0
  %v111 = vsel %vm73, %v63, 0
  %v114 = vsel %vm73, %v64, 0
  %v117 = vsel %vm73, %v65, 0
  %v120 = vsel %vm73, %v66, 0
  %122 = vmatprep.subr.mxu0 0.0
  %123 = vmatpush1.msra.mxu0 %v67
  %124 = vmatprep.subr.mxu0 0.0
  %125 = vmatpush1.msra.mxu0 %v68
  %126 = vmatprep.subr.mxu0 0.0
  %127 = vmatpush1.msra.mxu0 %v69
  %128 = vmatprep.subr.mxu0 0.0
  %129 = vmatpush1.msra.mxu0 %v70
  %130 = vmatprep.subr.mxu0 0.0
  %131 = vmatpush1.msra.mxu0 %v71
  %132 = vmatprep.subr.mxu0 0.0
  %133 = vmatpush1.msra.mxu0 %v72
  %134 = vmatprep.subr.mxu0 0.0
  %135 = vmatpush1.msra.mxu0 0.0
  %136 = vmatprep.subr.mxu0 0.0
  %137 = vmatpush1.msra.mxu0 0.0
  %138 = vmatprep.subr.mxu0 0.0
  %139 = vmatpush1.msra.mxu0 0.0
  %140 = vmatprep.subr.mxu0 0.0
  %141 = vmatpush1.msra.mxu0 0.0
  %142 = vmatprep.subr.mxu0 0.0
  %143 = vmatpush1.msra.mxu0 0.0
  %144 = vmatprep.subr.mxu0 0.0
  %145 = vmatpush1.msra.mxu0 0.0
  %146 = vmatprep.subr.mxu0 0.0
  %147 = vmatpush1.msra.mxu0 0.0
  %148 = vmatprep.subr.mxu0 0.0
  %149 = vmatpush1.msra.mxu0 0.0
  %150 = vmatprep.subr.mxu0 0.0
  %151 = vmatpush1.msra.mxu0 0.0
  %152 = vmatprep.subr.mxu0 0.0
  %153 = vmatpush1.msra.mxu0 0.0
  %154 = vmatprep.subr.mxu0 0.0
  %155 = vmatpush1.msra.mxu0 0.0
  %156 = vmatprep.subr.mxu0 0.0
  %157 = vmatpush1.msra.mxu0 0.0
  %158 = vmatprep.subr.mxu0 0.0
  %159 = vmatpush1.msra.mxu0 0.0
  %160 = vmatprep.subr.mxu0 0.0
  %161 = vmatpush1.msra.mxu0 0.0
  %162 = vmatprep.subr.mxu0 0.0
  %163 = vmatpush1.msra.mxu0 0.0
  %164 = vmatprep.subr.mxu0 0.0
  %165 = vmatpush1.msra.mxu0 0.0
  %166 = vmatprep.subr.mxu0 0.0
  %167 = vmatpush1.msra.mxu0 0.0
  %168 = vmatprep.subr.mxu0 0.0
  %169 = vmatpush1.msra.mxu0 0.0
  %170 = vmatprep.subr.mxu0 0.0
  %171 = vmatpush1.msra.mxu0 0.0
  %172 = vmatprep.subr.mxu0 0.0
  %173 = vmatpush1.msra.mxu0 0.0
  %174 = vmatprep.subr.mxu0 0.0
  %175 = vmatpush1.msra.mxu0 0.0
  %176 = vmatprep.subr.mxu0 0.0
  %177 = vmatpush1.msra.mxu0 0.0
  %178 = vmatprep.subr.mxu0 0.0
  %179 = vmatpush1.msra.mxu0 0.0
  %180 = vmatprep.subr.mxu0 0.0
  %181 = vmatpush1.msra.mxu0 0.0
  %182 = vmatprep.subr.mxu0 0.0
  %183 = vmatpush1.msra.mxu0 0.0
  %184 = vmatprep.subr.mxu0 0.0
  %185 = vmatpush1.msra.mxu0 0.0
  %186 = vmatprep.mubr.f32.mxu0 0.0
  %187 = vmatmul.mubr.f32.gmra.mrb[0].mxu0 %v75
  %v188 = vpop.f32.mrb[0].mxu0
  %v189 = vadd.f32 0.0, %v188
  %v190 = vpop.f32.mrb[0].mxu0
  %191 = vmatprep.mubr.f32.mxu0 0.0
  %192 = vmatmul.mubr.f32.gmra.mrb[0].mxu0 %v78
  %v193 = vpop.f32.mrb[0].mxu0
  %v194 = vadd.f32 0.0, %v193
  %v195 = vpop.f32.mrb[0].mxu0
  %196 = vmatprep.mubr.f32.mxu0 0.0
  %197 = vmatmul.mubr.f32.gmra.mrb[0].mxu0 %v81
  %v198 = vpop.f32.mrb[0].mxu0
  %v199 = vadd.f32 0.0, %v198
  %v200 = vpop.f32.mrb[0].mxu0
  %201 = vmatprep.mubr.f32.mxu0 0.0
  %202 = vmatmul.mubr.f32.gmra.mrb[0].mxu0 %v84
  %v203 = vpop.f32.mrb[0].mxu0
  %v204 = vadd.f32 0.0, %v203
  %v205 = vpop.f32.mrb[0].mxu0
  %206 = vmatprep.mubr.f32.mxu0 0.0
  %207 = vmatmul.mubr.f32.gmra.mrb[0].mxu0 %v87
  %v208 = vpop.f32.mrb[0].mxu0
  %v209 = vadd.f32 0.0, %v208
  %v210 = vpop.f32.mrb[0].mxu0
  %211 = vmatprep.mubr.f32.mxu0 0.0
  %212 = vmatmul.mubr.f32.gmra.mrb[0].mxu0 %v90
  %v213 = vpop.f32.mrb[0].mxu0
  %v214 = vadd.f32 0.0, %v213
  %v215 = vpop.f32.mrb[0].mxu0
  %216 = vmatprep.mubr.f32.mxu0 0.0
  %217 = vmatmul.mubr.f32.gmra.mrb[0].mxu0 %v93
  %v218 = vpop.f32.mrb[0].mxu0
  %v219 = vadd.f32 0.0, %v218
  %v220 = vpop.f32.mrb[0].mxu0
  %221 = vmatprep.mubr.f32.mxu0 0.0
  %222 = vmatmul.mubr.f32.gmra.mrb[0].mxu0 %v96
  %v223 = vpop.f32.mrb[0].mxu0
  %v224 = vadd.f32 0.0, %v223
  %v225 = vpop.f32.mrb[0].mxu0
  %226 = vmatprep.mubr.f32.mxu0 0.0
  %227 = vmatmul.mubr.f32.gmra.mrb[0].mxu0 %v99
  %v228 = vpop.f32.mrb[0].mxu0
  %v229 = vadd.f32 0.0, %v228
  %v230 = vpop.f32.mrb[0].mxu0
  %231 = vmatprep.mubr.f32.mxu0 0.0
  %232 = vmatmul.mubr.f32.gmra.mrb[0].mxu0 %v102
  %v233 = vpop.f32.mrb[0].mxu0
  %v234 = vadd.f32 0.0, %v233
  %v235 = vpop.f32.mrb[0].mxu0
  %236 = vmatprep.mubr.f32.mxu0 0.0
  %237 = vmatmul.mubr.f32.gmra.mrb[0].mxu0 %v105
  %v238 = vpop.f32.mrb[0].mxu0
  %v239 = vadd.f32 0.0, %v238
  %v240 = vpop.f32.mrb[0].mxu0
  %241 = vmatprep.mubr.f32.mxu0 0.0
  %242 = vmatmul.mubr.f32.gmra.mrb[0].mxu0 %v108
  %v243 = vpop.f32.mrb[0].mxu0
  %v244 = vadd.f32 0.0, %v243
  %v245 = vpop.f32.mrb[0].mxu0
  %246 = vmatprep.mubr.f32.mxu0 0.0
  %247 = vmatmul.mubr.f32.gmra.mrb[0].mxu0 %v111
  %v248 = vpop.f32.mrb[0].mxu0
  %v249 = vadd.f32 0.0, %v248
  %v250 = vpop.f32.mrb[0].mxu0
  %251 = vmatprep.mubr.f32.mxu0 0.0
  %252 = vmatmul.mubr.f32.gmra.mrb[0].mxu0 %v114
  %v253 = vpop.f32.mrb[0].mxu0
  %v254 = vadd.f32 0.0, %v253
  %v255 = vpop.f32.mrb[0].mxu0
  %256 = vmatprep.mubr.f32.mxu0 0.0
  %257 = vmatmul.mubr.f32.gmra.mrb[0].mxu0 %v117
  %v258 = vpop.f32.mrb[0].mxu0
  %v259 = vadd.f32 0.0, %v258
  %v260 = vpop.f32.mrb[0].mxu0
  %261 = vmatprep.mubr.f32.mxu0 0.0
  %262 = vmatmul.mubr.f32.gmra.mrb[0].mxu0 %v120
  %v263 = vpop.f32.mrb[0].mxu0
  %v264 = vadd.f32 0.0, %v263
  %v265 = vpop.f32.mrb[0].mxu0
  %266 = vdwg.mxu0
  %v267 = vadd.f32 %v35, %v189
  %v268 = vadd.f32 %v36, %v194
  %v269 = vadd.f32 %v37, %v199
  %v270 = vadd.f32 %v38, %v204
  %v271 = vadd.f32 %v39, %v209
  %v272 = vadd.f32 %v40, %v214
  %v273 = vadd.f32 %v41, %v219
  %v274 = vadd.f32 %v42, %v224
  %v275 = vadd.f32 %v43, %v229
  %v276 = vadd.f32 %v44, %v234
  %v277 = vadd.f32 %v45, %v239
  %v278 = vadd.f32 %v46, %v244
  %v279 = vadd.f32 %v47, %v249
  %v280 = vadd.f32 %v48, %v254
  %v281 = vadd.f32 %v49, %v259
  %v282 = vadd.f32 %v50, %v264
  %vm283 = vcmask 64512
  %284 = vst.msk [vmem:[#allocation2] sm:$0xff] %vm283, %v267
  %285 = vst.msk [vmem:[#allocation2 + $0x8] sm:$0xff] %vm283, %v268
  %286 = vst.msk [vmem:[#allocation2 + $0x10] sm:$0xff] %vm283, %v269
  %287 = vst.msk [vmem:[#allocation2 + $0x18] sm:$0xff] %vm283, %v270
  %288 = vst.msk [vmem:[#allocation2 + $0x20] sm:$0xff] %vm283, %v271
  %289 = vst.msk [vmem:[#allocation2 + $0x28] sm:$0xff] %vm283, %v272
  %290 = vst.msk [vmem:[#allocation2 + $0x30] sm:$0xff] %vm283, %v273
  %291 = vst.msk [vmem:[#allocation2 + $0x38] sm:$0xff] %vm283, %v274
  %292 = vst.msk [vmem:[#allocation2 + $0x40] sm:$0xff] %vm283, %v275
  %293 = vst.msk [vmem:[#allocation2 + $0x48] sm:$0xff] %vm283, %v276
  %294 = vst.msk [vmem:[#allocation2 + $0x50] sm:$0xff] %vm283, %v277
  %295 = vst.msk [vmem:[#allocation2 + $0x58] sm:$0xff] %vm283, %v278
  %296 = vst.msk [vmem:[#allocation2 + $0x60] sm:$0xff] %vm283, %v279
  %297 = vst.msk [vmem:[#allocation2 + $0x68] sm:$0xff] %vm283, %v280
  %298 = vst.msk [vmem:[#allocation2 + $0x70] sm:$0xff] %vm283, %v281
  %299 = vst.msk [vmem:[#allocation2 + $0x78] sm:$0xff] %vm283, %v282
  // Predicated region
  $region18: #{discriminator_forward.5} parent=0 // pred_check
    %p300 = pneg %p14
  $region19: #{discriminator_forward.5} parent=0 // pred_check_branch
    %302 = sbr.rel (%p300) target = $region21
  $region20: #{discriminator_forward.5} parent=0 // pred_region
    %v303 = vld [vmem:[#allocation2] sm:$0xff]
    %v304 = vld [vmem:[#allocation2 + $0x8] sm:$0xff]
    %v305 = vld [vmem:[#allocation2 + $0x10] sm:$0xff]
    %v306 = vld [vmem:[#allocation2 + $0x18] sm:$0xff]
    %v307 = vld [vmem:[#allocation2 + $0x20] sm:$0xff]
    %v308 = vld [vmem:[#allocation2 + $0x28] sm:$0xff]
    %v309 = vld [vmem:[#allocation2 + $0x30] sm:$0xff]
    %v310 = vld [vmem:[#allocation2 + $0x38] sm:$0xff]
    %v311 = vld [vmem:[#allocation2 + $0x40] sm:$0xff]
    %v312 = vld [vmem:[#allocation2 + $0x48] sm:$0xff]
    %v313 = vld [vmem:[#allocation2 + $0x50] sm:$0xff]
    %v314 = vld [vmem:[#allocation2 + $0x58] sm:$0xff]
    %v315 = vld [vmem:[#allocation2 + $0x60] sm:$0xff]
    %v316 = vld [vmem:[#allocation2 + $0x68] sm:$0xff]
    %v317 = vld [vmem:[#allocation2 + $0x70] sm:$0xff]
    %v318 = vld [vmem:[#allocation2 + $0x78] sm:$0xff]
    %v319 = vld [vmem:[%s2] sm:$0x1]
    %v321 = vlaneseq
    %v322 = vshrl.u32 %v321, 7
    %v323 = vsub.s32 0, %v322
    %v324 = vrot.slane %v319, %v323
    %v326 = vadd.f32 %v303, %v324
    %v327 = vadd.f32 %v304, %v324
    %v328 = vadd.f32 %v305, %v324
    %v329 = vadd.f32 %v306, %v324
    %v330 = vadd.f32 %v307, %v324
    %v331 = vadd.f32 %v308, %v324
    %v332 = vadd.f32 %v309, %v324
    %v333 = vadd.f32 %v310, %v324
    %v334 = vadd.f32 %v311, %v324
    %v335 = vadd.f32 %v312, %v324
    %v336 = vadd.f32 %v313, %v324
    %v337 = vadd.f32 %v314, %v324
    %v338 = vadd.f32 %v315, %v324
    %v339 = vadd.f32 %v316, %v324
    %v340 = vadd.f32 %v317, %v324
    %v341 = vadd.f32 %v318, %v324
    %vm342 = vcmp.gt.f32.partialorder %v326, 0.0
    %vm343 = vcmp.gt.f32.partialorder %v327, 0.0
    %vm344 = vcmp.gt.f32.partialorder %v328, 0.0
    %vm345 = vcmp.gt.f32.partialorder %v329, 0.0
    %vm346 = vcmp.gt.f32.partialorder %v330, 0.0
    %vm347 = vcmp.gt.f32.partialorder %v331, 0.0
    %vm348 = vcmp.gt.f32.partialorder %v332, 0.0
    %vm349 = vcmp.gt.f32.partialorder %v333, 0.0
    %vm350 = vcmp.gt.f32.partialorder %v334, 0.0
    %vm351 = vcmp.gt.f32.partialorder %v335, 0.0
    %vm352 = vcmp.gt.f32.partialorder %v336, 0.0
    %vm353 = vcmp.gt.f32.partialorder %v337, 0.0
    %vm354 = vcmp.gt.f32.partialorder %v338, 0.0
    %vm355 = vcmp.gt.f32.partialorder %v339, 0.0
    %vm356 = vcmp.gt.f32.partialorder %v340, 0.0
    %vm357 = vcmp.gt.f32.partialorder %v341, 0.0
    %v358 = vmul.f32 %v326, 0.01
    %v359 = vmul.f32 %v327, 0.01
    %v360 = vmul.f32 %v328, 0.01
    %v361 = vmul.f32 %v329, 0.01
    %v362 = vmul.f32 %v330, 0.01
    %v363 = vmul.f32 %v331, 0.01
    %v364 = vmul.f32 %v332, 0.01
    %v365 = vmul.f32 %v333, 0.01
    %v366 = vmul.f32 %v334, 0.01
    %v367 = vmul.f32 %v335, 0.01
    %v368 = vmul.f32 %v336, 0.01
    %v369 = vmul.f32 %v337, 0.01
    %v370 = vmul.f32 %v338, 0.01
    %v371 = vmul.f32 %v339, 0.01
    %v372 = vmul.f32 %v340, 0.01
    %v373 = vmul.f32 %v341, 0.01
    %v374 = vsel %vm342, %v326, %v358
    %v375 = vsel %vm343, %v327, %v359
    %v376 = vsel %vm344, %v328, %v360
    %v377 = vsel %vm345, %v329, %v361
    %v378 = vsel %vm346, %v330, %v362
    %v379 = vsel %vm347, %v331, %v363
    %v380 = vsel %vm348, %v332, %v364
    %v381 = vsel %vm349, %v333, %v365
    %v382 = vsel %vm350, %v334, %v366
    %v383 = vsel %vm351, %v335, %v367
    %v384 = vsel %vm352, %v336, %v368
    %v385 = vsel %vm353, %v337, %v369
    %v386 = vsel %vm354, %v338, %v370
    %v387 = vsel %vm355, %v339, %v371
    %v388 = vsel %vm356, %v340, %v372
    %v389 = vsel %vm357, %v341, %v373
    %390 = vst.msk [vmem:[%s3] sm:$0xff] %vm283, %v374
    %391 = vst.msk [vmem:[%s3 + $0x8] sm:$0xff] %vm283, %v375
    %392 = vst.msk [vmem:[%s3 + $0x10] sm:$0xff] %vm283, %v376
    %393 = vst.msk [vmem:[%s3 + $0x18] sm:$0xff] %vm283, %v377
    %394 = vst.msk [vmem:[%s3 + $0x20] sm:$0xff] %vm283, %v378
    %395 = vst.msk [vmem:[%s3 + $0x28] sm:$0xff] %vm283, %v379
    %396 = vst.msk [vmem:[%s3 + $0x30] sm:$0xff] %vm283, %v380
    %397 = vst.msk [vmem:[%s3 + $0x38] sm:$0xff] %vm283, %v381
    %398 = vst.msk [vmem:[%s3 + $0x40] sm:$0xff] %vm283, %v382
    %399 = vst.msk [vmem:[%s3 + $0x48] sm:$0xff] %vm283, %v383
    %400 = vst.msk [vmem:[%s3 + $0x50] sm:$0xff] %vm283, %v384
    %401 = vst.msk [vmem:[%s3 + $0x58] sm:$0xff] %vm283, %v385
    %402 = vst.msk [vmem:[%s3 + $0x60] sm:$0xff] %vm283, %v386
    %403 = vst.msk [vmem:[%s3 + $0x68] sm:$0xff] %vm283, %v387
    %404 = vst.msk [vmem:[%s3 + $0x70] sm:$0xff] %vm283, %v388
    %405 = vst.msk [vmem:[%s3 + $0x78] sm:$0xff] %vm283, %v389
  $region21: #{discriminator_forward.5} parent=0 // pred_fallthru
    _
  // Predicated region
  $region22: #{discriminator_forward.5} parent=0 // pred_check
    _
  $region23: #{discriminator_forward.5} parent=0 // pred_check_branch
    %407 = sbr.rel (0) target = $region25
  $region24: #{discriminator_forward.5} parent=0 // pred_region
    _
  $region25: #{discriminator_forward.5} parent=0 // pred_fallthru
    _
  // Predicated region
  $region26: #{discriminator_forward.5} parent=0 // pred_check
    _
  $region27: #{discriminator_forward.5} parent=0 // pred_check_branch
    %409 = sbr.rel (0) target = $region29
  $region28: #{discriminator_forward.5} parent=0 // pred_region
    _
  $region29: #{discriminator_forward.5} parent=0 // pred_fallthru
    _

// kernel: discriminator_forward.6
$region0: #{discriminator_forward.6}
  #allocation0 [shape = 'u32[]', space=smem, size = 0x4, offset = 0x4, fixed_abs, tag = 'smem constant byte address 0x4 - core index']
  #allocation1 [shape = 'u32[144,128]{1,0:T(1,128)}', space=vmem, size = 0x12000, scoped, tag = 'internal scratch']
  #allocation2 [shape = 'f32[32,16]{1,0:T(8,128)}', space=vmem, size = 0x4000, scoped, tag = 'scratch operand']
  %s0 = inlined_call_operand.vmem [shape: f32[32,128], index: 0, kind: input, shape index: {}]
  %s1 = inlined_call_operand.vmem [shape: f32[128,16], index: 1, kind: input, shape index: {}]
  %s2 = inlined_call_operand.vmem [shape: f32[1,16], index: 2, kind: input, shape index: {}]
  %s3 = inlined_call_operand.vmem [shape: f32[32,16], index: 3, kind: output, shape index: {}]
  %s4 = sld [smem:[#allocation0]]
  $region30: #{discriminator_forward.6} parent=0
    _
  %s6 = ssub.s32 1, %s4
  %s7 = scalar_select 0, %s6, %s4
  // Predicated region
  $region2: #{discriminator_forward.6} parent=0 // pred_check
    _
  $region3: #{discriminator_forward.6} parent=0 // pred_check_branch
    %9 = sbr.rel (0) target = $region5
  $region4: #{discriminator_forward.6} parent=0 // pred_region
    _
  $region5: #{discriminator_forward.6} parent=0 // pred_fallthru
    _
  // Predicated region
  $region6: #{discriminator_forward.6} parent=0 // pred_check
    _
  $region7: #{discriminator_forward.6} parent=0 // pred_check_branch
    %11 = sbr.rel (0) target = $region9
  $region8: #{discriminator_forward.6} parent=0 // pred_region
    _
  $region9: #{discriminator_forward.6} parent=0 // pred_fallthru
    _
  // Predicated region
  $region10: #{discriminator_forward.6} parent=0 // pred_check
    _
  $region11: #{discriminator_forward.6} parent=0 // pred_check_branch
    %13 = sbr.rel (0) target = $region13
  $region12: #{discriminator_forward.6} parent=0 // pred_region
    _
  $region13: #{discriminator_forward.6} parent=0 // pred_fallthru
    _
  %p14 = scmp.eq.s32.totalorder 0, 0
  // Predicated region
  $region14: #{discriminator_forward.6} parent=0 // pred_check
    %p15 = pneg %p14
  $region15: #{discriminator_forward.6} parent=0 // pred_check_branch
    %17 = sbr.rel (%p15) target = $region17
  $region16: #{discriminator_forward.6} parent=0 // pred_region
    %vm18 = vcmask 130048
    %19 = vst.msk [vmem:[#allocation2] sm:$0xff] %vm18, 0.0
    %20 = vst.msk [vmem:[#allocation2 + $0x8] sm:$0xff] %vm18, 0.0
    %21 = vst.msk [vmem:[#allocation2 + $0x10] sm:$0xff] %vm18, 0.0
    %22 = vst.msk [vmem:[#allocation2 + $0x18] sm:$0xff] %vm18, 0.0
  $region17: #{discriminator_forward.6} parent=0 // pred_fallthru
    _
  %v23 = vld [vmem:[#allocation2] sm:$0xff]
  %v24 = vld [vmem:[#allocation2 + $0x8] sm:$0xff]
  %v25 = vld [vmem:[#allocation2 + $0x10] sm:$0xff]
  %v26 = vld [vmem:[#allocation2 + $0x18] sm:$0xff]
  %v27 = vld [vmem:[%s0] sm:$0xff]
  %v28 = vld [vmem:[%s0 + $0x8] sm:$0xff]
  %v29 = vld [vmem:[%s0 + $0x10] sm:$0xff]
  %v30 = vld [vmem:[%s0 + $0x18] sm:$0xff]
  %v31 = vld [vmem:[%s1] sm:$0xff]
  %v32 = vld [vmem:[%s1 + $0x8] sm:$0xff]
  %v33 = vld [vmem:[%s1 + $0x10] sm:$0xff]
  %v34 = vld [vmem:[%s1 + $0x18] sm:$0xff]
  %v35 = vld [vmem:[%s1 + $0x20] sm:$0xff]
  %v36 = vld [vmem:[%s1 + $0x28] sm:$0xff]
  %v37 = vld [vmem:[%s1 + $0x30] sm:$0xff]
  %v38 = vld [vmem:[%s1 + $0x38] sm:$0xff]
  %v39 = vld [vmem:[%s1 + $0x40] sm:$0xff]
  %v40 = vld [vmem:[%s1 + $0x48] sm:$0xff]
  %v41 = vld [vmem:[%s1 + $0x50] sm:$0xff]
  %v42 = vld [vmem:[%s1 + $0x58] sm:$0xff]
  %v43 = vld [vmem:[%s1 + $0x60] sm:$0xff]
  %v44 = vld [vmem:[%s1 + $0x68] sm:$0xff]
  %v45 = vld [vmem:[%s1 + $0x70] sm:$0xff]
  %v46 = vld [vmem:[%s1 + $0x78] sm:$0xff]
  %47 = vmatprep.subr.mxu0 0.0
  %48 = vmatpush1.msra.mxu0 %v31
  %49 = vmatprep.subr.mxu0 0.0
  %50 = vmatpush1.msra.mxu0 %v32
  %51 = vmatprep.subr.mxu0 0.0
  %52 = vmatpush1.msra.mxu0 %v33
  %53 = vmatprep.subr.mxu0 0.0
  %54 = vmatpush1.msra.mxu0 %v34
  %55 = vmatprep.subr.mxu0 0.0
  %56 = vmatpush1.msra.mxu0 %v35
  %57 = vmatprep.subr.mxu0 0.0
  %58 = vmatpush1.msra.mxu0 %v36
  %59 = vmatprep.subr.mxu0 0.0
  %60 = vmatpush1.msra.mxu0 %v37
  %61 = vmatprep.subr.mxu0 0.0
  %62 = vmatpush1.msra.mxu0 %v38
  %63 = vmatprep.subr.mxu0 0.0
  %64 = vmatpush1.msra.mxu0 %v39
  %65 = vmatprep.subr.mxu0 0.0
  %66 = vmatpush1.msra.mxu0 %v40
  %67 = vmatprep.subr.mxu0 0.0
  %68 = vmatpush1.msra.mxu0 %v41
  %69 = vmatprep.subr.mxu0 0.0
  %70 = vmatpush1.msra.mxu0 %v42
  %71 = vmatprep.subr.mxu0 0.0
  %72 = vmatpush1.msra.mxu0 %v43
  %73 = vmatprep.subr.mxu0 0.0
  %74 = vmatpush1.msra.mxu0 %v44
  %75 = vmatprep.subr.mxu0 0.0
  %76 = vmatpush1.msra.mxu0 %v45
  %77 = vmatprep.subr.mxu0 0.0
  %78 = vmatpush1.msra.mxu0 %v46
  %79 = vmatprep.subr.mxu0 0.0
  %80 = vmatpush1.msra.mxu0 0.0
  %81 = vmatprep.subr.mxu0 0.0
  %82 = vmatpush1.msra.mxu0 0.0
  %83 = vmatprep.subr.mxu0 0.0
  %84 = vmatpush1.msra.mxu0 0.0
  %85 = vmatprep.subr.mxu0 0.0
  %86 = vmatpush1.msra.mxu0 0.0
  %87 = vmatprep.subr.mxu0 0.0
  %88 = vmatpush1.msra.mxu0 0.0
  %89 = vmatprep.subr.mxu0 0.0
  %90 = vmatpush1.msra.mxu0 0.0
  %91 = vmatprep.subr.mxu0 0.0
  %92 = vmatpush1.msra.mxu0 0.0
  %93 = vmatprep.subr.mxu0 0.0
  %94 = vmatpush1.msra.mxu0 0.0
  %95 = vmatprep.subr.mxu0 0.0
  %96 = vmatpush1.msra.mxu0 0.0
  %97 = vmatprep.subr.mxu0 0.0
  %98 = vmatpush1.msra.mxu0 0.0
  %99 = vmatprep.subr.mxu0 0.0
  %100 = vmatpush1.msra.mxu0 0.0
  %101 = vmatprep.subr.mxu0 0.0
  %102 = vmatpush1.msra.mxu0 0.0
  %103 = vmatprep.subr.mxu0 0.0
  %104 = vmatpush1.msra.mxu0 0.0
  %105 = vmatprep.subr.mxu0 0.0
  %106 = vmatpush1.msra.mxu0 0.0
  %107 = vmatprep.subr.mxu0 0.0
  %108 = vmatpush1.msra.mxu0 0.0
  %109 = vmatprep.subr.mxu0 0.0
  %110 = vmatpush1.msra.mxu0 0.0
  %111 = vmatprep.mubr.f32.mxu0 0.0
  %112 = vmatmul.mubr.f32.gmra.mrb[0].mxu0 %v27
  %v113 = vpop.f32.mrb[0].mxu0
  %v114 = vadd.f32 0.0, %v113
  %v115 = vpop.f32.mrb[0].mxu0
  %116 = vmatprep.mubr.f32.mxu0 0.0
  %117 = vmatmul.mubr.f32.gmra.mrb[0].mxu0 %v28
  %v118 = vpop.f32.mrb[0].mxu0
  %v119 = vadd.f32 0.0, %v118
  %v120 = vpop.f32.mrb[0].mxu0
  %121 = vmatprep.mubr.f32.mxu0 0.0
  %122 = vmatmul.mubr.f32.gmra.mrb[0].mxu0 %v29
  %v123 = vpop.f32.mrb[0].mxu0
  %v124 = vadd.f32 0.0, %v123
  %v125 = vpop.f32.mrb[0].mxu0
  %126 = vmatprep.mubr.f32.mxu0 0.0
  %127 = vmatmul.mubr.f32.gmra.mrb[0].mxu0 %v30
  %v128 = vpop.f32.mrb[0].mxu0
  %v129 = vadd.f32 0.0, %v128
  %v130 = vpop.f32.mrb[0].mxu0
  %131 = vdwg.mxu0
  %v132 = vadd.f32 %v23, %v114
  %v133 = vadd.f32 %v24, %v119
  %v134 = vadd.f32 %v25, %v124
  %v135 = vadd.f32 %v26, %v129
  %vm136 = vcmask 130048
  %137 = vst.msk [vmem:[#allocation2] sm:$0xff] %vm136, %v132
  %138 = vst.msk [vmem:[#allocation2 + $0x8] sm:$0xff] %vm136, %v133
  %139 = vst.msk [vmem:[#allocation2 + $0x10] sm:$0xff] %vm136, %v134
  %140 = vst.msk [vmem:[#allocation2 + $0x18] sm:$0xff] %vm136, %v135
  // Predicated region
  $region18: #{discriminator_forward.6} parent=0 // pred_check
    %p141 = pneg %p14
  $region19: #{discriminator_forward.6} parent=0 // pred_check_branch
    %143 = sbr.rel (%p141) target = $region21
  $region20: #{discriminator_forward.6} parent=0 // pred_region
    %v144 = vld [vmem:[#allocation2] sm:$0xff]
    %v145 = vld [vmem:[#allocation2 + $0x8] sm:$0xff]
    %v146 = vld [vmem:[#allocation2 + $0x10] sm:$0xff]
    %v147 = vld [vmem:[#allocation2 + $0x18] sm:$0xff]
    %v148 = vld [vmem:[%s2] sm:$0x1]
    %v150 = vlaneseq
    %v151 = vshrl.u32 %v150, 7
    %v152 = vsub.s32 0, %v151
    %v153 = vrot.slane %v148, %v152
    %v155 = vadd.f32 %v144, %v153
    %v156 = vadd.f32 %v145, %v153
    %v157 = vadd.f32 %v146, %v153
    %v158 = vadd.f32 %v147, %v153
    %vm159 = vcmp.gt.f32.partialorder %v155, 0.0
    %vm160 = vcmp.gt.f32.partialorder %v156, 0.0
    %vm161 = vcmp.gt.f32.partialorder %v157, 0.0
    %vm162 = vcmp.gt.f32.partialorder %v158, 0.0
    %v163 = vmul.f32 %v155, 0.01
    %v164 = vmul.f32 %v156, 0.01
    %v165 = vmul.f32 %v157, 0.01
    %v166 = vmul.f32 %v158, 0.01
    %v167 = vsel %vm159, %v155, %v163
    %v168 = vsel %vm160, %v156, %v164
    %v169 = vsel %vm161, %v157, %v165
    %v170 = vsel %vm162, %v158, %v166
    %171 = vst.msk [vmem:[%s3] sm:$0xff] %vm136, %v167
    %172 = vst.msk [vmem:[%s3 + $0x8] sm:$0xff] %vm136, %v168
    %173 = vst.msk [vmem:[%s3 + $0x10] sm:$0xff] %vm136, %v169
    %174 = vst.msk [vmem:[%s3 + $0x18] sm:$0xff] %vm136, %v170
  $region21: #{discriminator_forward.6} parent=0 // pred_fallthru
    _
  // Predicated region
  $region22: #{discriminator_forward.6} parent=0 // pred_check
    _
  $region23: #{discriminator_forward.6} parent=0 // pred_check_branch
    %176 = sbr.rel (0) target = $region25
  $region24: #{discriminator_forward.6} parent=0 // pred_region
    _
  $region25: #{discriminator_forward.6} parent=0 // pred_fallthru
    _
  // Predicated region
  $region26: #{discriminator_forward.6} parent=0 // pred_check
    _
  $region27: #{discriminator_forward.6} parent=0 // pred_check_branch
    %178 = sbr.rel (0) target = $region29
  $region28: #{discriminator_forward.6} parent=0 // pred_region
    _
  $region29: #{discriminator_forward.6} parent=0 // pred_fallthru
    _

// kernel: discriminator_forward.7
$region0: #{discriminator_forward.7}
  #allocation0 [shape = 'u32[]', space=smem, size = 0x4, offset = 0x4, fixed_abs, tag = 'smem constant byte address 0x4 - core index']
  #allocation1 [shape = 'u32[144,128]{1,0:T(1,128)}', space=vmem, size = 0x12000, scoped, tag = 'internal scratch']
  #allocation2 [shape = 'f32[8,32]{1,0:T(8,128)}', space=vmem, size = 0x1000, scoped, tag = 'scratch operand']
  %s0 = inlined_call_operand.vmem [shape: f32[8,256], index: 0, kind: input, shape index: {}]
  %s1 = inlined_call_operand.vmem [shape: f32[256,32], index: 1, kind: input, shape index: {}]
  %s2 = inlined_call_operand.vmem [shape: f32[1,32], index: 2, kind: input, shape index: {}]
  %s3 = inlined_call_operand.vmem [shape: f32[8,32], index: 3, kind: output, shape index: {}]
  %s4 = sld [smem:[#allocation0]]
  $region30: #{discriminator_forward.7} parent=0
    _
  %s6 = ssub.s32 1, %s4
  %s7 = scalar_select 0, %s6, %s4
  // Predicated region
  $region2: #{discriminator_forward.7} parent=0 // pred_check
    _
  $region3: #{discriminator_forward.7} parent=0 // pred_check_branch
    %9 = sbr.rel (0) target = $region5
  $region4: #{discriminator_forward.7} parent=0 // pred_region
    _
  $region5: #{discriminator_forward.7} parent=0 // pred_fallthru
    _
  // Predicated region
  $region6: #{discriminator_forward.7} parent=0 // pred_check
    _
  $region7: #{discriminator_forward.7} parent=0 // pred_check_branch
    %11 = sbr.rel (0) target = $region9
  $region8: #{discriminator_forward.7} parent=0 // pred_region
    _
  $region9: #{discriminator_forward.7} parent=0 // pred_fallthru
    _
  // Predicated region
  $region10: #{discriminator_forward.7} parent=0 // pred_check
    _
  $region11: #{discriminator_forward.7} parent=0 // pred_check_branch
    %13 = sbr.rel (0) target = $region13
  $region12: #{discriminator_forward.7} parent=0 // pred_region
    _
  $region13: #{discriminator_forward.7} parent=0 // pred_fallthru
    _
  %p14 = scmp.eq.s32.totalorder 0, 0
  // Predicated region
  $region14: #{discriminator_forward.7} parent=0 // pred_check
    %p15 = pneg %p14
  $region15: #{discriminator_forward.7} parent=0 // pred_check_branch
    %17 = sbr.rel (%p15) target = $region17
  $region16: #{discriminator_forward.7} parent=0 // pred_region
    %vm18 = vcmask 261120
    %19 = vst.msk [vmem:[#allocation2] sm:$0xff] %vm18, 0.0
  $region17: #{discriminator_forward.7} parent=0 // pred_fallthru
    _
  %v20 = vld [vmem:[#allocation2] sm:$0xff]
  %v21 = vld [vmem:[%s0] sm:$0xff]
  %v22 = vld [vmem:[%s0 + $0x8] sm:$0xff]
  %v23 = vld [vmem:[%s1] sm:$0xff]
  %v24 = vld [vmem:[%s1 + $0x8] sm:$0xff]
  %v25 = vld [vmem:[%s1 + $0x10] sm:$0xff]
  %v26 = vld [vmem:[%s1 + $0x18] sm:$0xff]
  %v27 = vld [vmem:[%s1 + $0x20] sm:$0xff]
  %v28 = vld [vmem:[%s1 + $0x28] sm:$0xff]
  %v29 = vld [vmem:[%s1 + $0x30] sm:$0xff]
  %v30 = vld [vmem:[%s1 + $0x38] sm:$0xff]
  %v31 = vld [vmem:[%s1 + $0x40] sm:$0xff]
  %v32 = vld [vmem:[%s1 + $0x48] sm:$0xff]
  %v33 = vld [vmem:[%s1 + $0x50] sm:$0xff]
  %v34 = vld [vmem:[%s1 + $0x58] sm:$0xff]
  %v35 = vld [vmem:[%s1 + $0x60] sm:$0xff]
  %v36 = vld [vmem:[%s1 + $0x68] sm:$0xff]
  %v37 = vld [vmem:[%s1 + $0x70] sm:$0xff]
  %v38 = vld [vmem:[%s1 + $0x78] sm:$0xff]
  %v39 = vld [vmem:[%s1 + $0x80] sm:$0xff]
  %v40 = vld [vmem:[%s1 + $0x88] sm:$0xff]
  %v41 = vld [vmem:[%s1 + $0x90] sm:$0xff]
  %v42 = vld [vmem:[%s1 + $0x98] sm:$0xff]
  %v43 = vld [vmem:[%s1 + $0xa0] sm:$0xff]
  %v44 = vld [vmem:[%s1 + $0xa8] sm:$0xff]
  %v45 = vld [vmem:[%s1 + $0xb0] sm:$0xff]
  %v46 = vld [vmem:[%s1 + $0xb8] sm:$0xff]
  %v47 = vld [vmem:[%s1 + $0xc0] sm:$0xff]
  %v48 = vld [vmem:[%s1 + $0xc8] sm:$0xff]
  %v49 = vld [vmem:[%s1 + $0xd0] sm:$0xff]
  %v50 = vld [vmem:[%s1 + $0xd8] sm:$0xff]
  %v51 = vld [vmem:[%s1 + $0xe0] sm:$0xff]
  %v52 = vld [vmem:[%s1 + $0xe8] sm:$0xff]
  %v53 = vld [vmem:[%s1 + $0xf0] sm:$0xff]
  %v54 = vld [vmem:[%s1 + $0xf8] sm:$0xff]
  %55 = vmatprep.subr.mxu0 0.0
  %56 = vmatpush1.msra.mxu0 %v23
  %57 = vmatprep.subr.mxu0 0.0
  %58 = vmatpush1.msra.mxu0 %v24
  %59 = vmatprep.subr.mxu0 0.0
  %60 = vmatpush1.msra.mxu0 %v25
  %61 = vmatprep.subr.mxu0 0.0
  %62 = vmatpush1.msra.mxu0 %v26
  %63 = vmatprep.subr.mxu0 0.0
  %64 = vmatpush1.msra.mxu0 %v27
  %65 = vmatprep.subr.mxu0 0.0
  %66 = vmatpush1.msra.mxu0 %v28
  %67 = vmatprep.subr.mxu0 0.0
  %68 = vmatpush1.msra.mxu0 %v29
  %69 = vmatprep.subr.mxu0 0.0
  %70 = vmatpush1.msra.mxu0 %v30
  %71 = vmatprep.subr.mxu0 0.0
  %72 = vmatpush1.msra.mxu0 %v31
  %73 = vmatprep.subr.mxu0 0.0
  %74 = vmatpush1.msra.mxu0 %v32
  %75 = vmatprep.subr.mxu0 0.0
  %76 = vmatpush1.msra.mxu0 %v33
  %77 = vmatprep.subr.mxu0 0.0
  %78 = vmatpush1.msra.mxu0 %v34
  %79 = vmatprep.subr.mxu0 0.0
  %80 = vmatpush1.msra.mxu0 %v35
  %81 = vmatprep.subr.mxu0 0.0
  %82 = vmatpush1.msra.mxu0 %v36
  %83 = vmatprep.subr.mxu0 0.0
  %84 = vmatpush1.msra.mxu0 %v37
  %85 = vmatprep.subr.mxu0 0.0
  %86 = vmatpush1.msra.mxu0 %v38
  %87 = vmatprep.subr.mxu0 0.0
  %88 = vmatpush1.msra.mxu0 %v39
  %89 = vmatprep.subr.mxu0 0.0
  %90 = vmatpush1.msra.mxu0 %v40
  %91 = vmatprep.subr.mxu0 0.0
  %92 = vmatpush1.msra.mxu0 %v41
  %93 = vmatprep.subr.mxu0 0.0
  %94 = vmatpush1.msra.mxu0 %v42
  %95 = vmatprep.subr.mxu0 0.0
  %96 = vmatpush1.msra.mxu0 %v43
  %97 = vmatprep.subr.mxu0 0.0
  %98 = vmatpush1.msra.mxu0 %v44
  %99 = vmatprep.subr.mxu0 0.0
  %100 = vmatpush1.msra.mxu0 %v45
  %101 = vmatprep.subr.mxu0 0.0
  %102 = vmatpush1.msra.mxu0 %v46
  %103 = vmatprep.subr.mxu0 0.0
  %104 = vmatpush1.msra.mxu0 %v47
  %105 = vmatprep.subr.mxu0 0.0
  %106 = vmatpush1.msra.mxu0 %v48
  %107 = vmatprep.subr.mxu0 0.0
  %108 = vmatpush1.msra.mxu0 %v49
  %109 = vmatprep.subr.mxu0 0.0
  %110 = vmatpush1.msra.mxu0 %v50
  %111 = vmatprep.subr.mxu0 0.0
  %112 = vmatpush1.msra.mxu0 %v51
  %113 = vmatprep.subr.mxu0 0.0
  %114 = vmatpush1.msra.mxu0 %v52
  %115 = vmatprep.subr.mxu0 0.0
  %116 = vmatpush1.msra.mxu0 %v53
  %117 = vmatprep.subr.mxu0 0.0
  %118 = vmatpush1.msra.mxu0 %v54
  %119 = vmatprep.mubr.f32.mxu0 %v22
  %120 = vmatmul.mubr.f32.gmra.mrb[0].mxu0 %v21
  %v121 = vpop.f32.mrb[0].mxu0
  %v122 = vadd.f32 0.0, %v121
  %v123 = vpop.f32.mrb[0].mxu0
  %124 = vdwg.mxu0
  %v125 = vadd.f32 %v20, %v122
  %vm126 = vcmask 261120
  %127 = vst.msk [vmem:[#allocation2] sm:$0xff] %vm126, %v125
  // Predicated region
  $region18: #{discriminator_forward.7} parent=0 // pred_check
    %p128 = pneg %p14
  $region19: #{discriminator_forward.7} parent=0 // pred_check_branch
    %130 = sbr.rel (%p128) target = $region21
  $region20: #{discriminator_forward.7} parent=0 // pred_region
    %v131 = vld [vmem:[#allocation2] sm:$0xff]
    %v132 = vld [vmem:[%s2] sm:$0x1]
    %v134 = vlaneseq
    %v135 = vshrl.u32 %v134, 7
    %v136 = vsub.s32 0, %v135
    %v137 = vrot.slane %v132, %v136
    %v139 = vadd.f32 %v131, %v137
    %vm140 = vcmp.gt.f32.partialorder %v139, 0.0
    %v141 = vmul.f32 %v139, 0.01
    %v142 = vsel %vm140, %v139, %v141
    %143 = vst.msk [vmem:[%s3] sm:$0xff] %vm126, %v142
  $region21: #{discriminator_forward.7} parent=0 // pred_fallthru
    _
  // Predicated region
  $region22: #{discriminator_forward.7} parent=0 // pred_check
    _
  $region23: #{discriminator_forward.7} parent=0 // pred_check_branch
    %145 = sbr.rel (0) target = $region25
  $region24: #{discriminator_forward.7} parent=0 // pred_region
    _
  $region25: #{discriminator_forward.7} parent=0 // pred_fallthru
    _
  // Predicated region
  $region26: #{discriminator_forward.7} parent=0 // pred_check
    _
  $region27: #{discriminator_forward.7} parent=0 // pred_check_branch
    %147 = sbr.rel (0) target = $region29
  $region28: #{discriminator_forward.7} parent=0 // pred_region
    _
  $region29: #{discriminator_forward.7} parent=0 // pred_fallthru
    _

// kernel: discriminator_forward.9
$region0: #{discriminator_forward.9}
  #allocation0 [shape = 'u32[]', space=smem, size = 0x4, offset = 0x4, fixed_abs, tag = 'smem constant byte address 0x4 - core index']
  #allocation1 [shape = 'u32[144,128]{1,0:T(1,128)}', space=vmem, size = 0x12000, scoped, tag = 'internal scratch']
  #allocation2 [shape = 'f32[2,128]{1,0:T(2,128)}', space=vmem, size = 0x400, scoped, tag = 'scratch operand']
  %s0 = inlined_call_operand.vmem [shape: f32[2,128], index: 0, kind: input, shape index: {}]
  %s1 = inlined_call_operand.vmem [shape: f32[128,128], index: 1, kind: input, shape index: {}]
  %s2 = inlined_call_operand.vmem [shape: f32[1,128], index: 2, kind: input, shape index: {}]
  %s3 = inlined_call_operand.vmem [shape: f32[2,128], index: 3, kind: output, shape index: {}]
  %s4 = sld [smem:[#allocation0]]
  $region30: #{discriminator_forward.9} parent=0
    _
  %s6 = ssub.s32 1, %s4
  %s7 = scalar_select 0, %s6, %s4
  // Predicated region
  $region2: #{discriminator_forward.9} parent=0 // pred_check
    _
  $region3: #{discriminator_forward.9} parent=0 // pred_check_branch
    %9 = sbr.rel (0) target = $region5
  $region4: #{discriminator_forward.9} parent=0 // pred_region
    _
  $region5: #{discriminator_forward.9} parent=0 // pred_fallthru
    _
  // Predicated region
  $region6: #{discriminator_forward.9} parent=0 // pred_check
    _
  $region7: #{discriminator_forward.9} parent=0 // pred_check_branch
    %11 = sbr.rel (0) target = $region9
  $region8: #{discriminator_forward.9} parent=0 // pred_region
    _
  $region9: #{discriminator_forward.9} parent=0 // pred_fallthru
    _
  // Predicated region
  $region10: #{discriminator_forward.9} parent=0 // pred_check
    _
  $region11: #{discriminator_forward.9} parent=0 // pred_check_branch
    %13 = sbr.rel (0) target = $region13
  $region12: #{discriminator_forward.9} parent=0 // pred_region
    _
  $region13: #{discriminator_forward.9} parent=0 // pred_fallthru
    _
  %p14 = scmp.eq.s32.totalorder 0, 0
  // Predicated region
  $region14: #{discriminator_forward.9} parent=0 // pred_check
    %p15 = pneg %p14
  $region15: #{discriminator_forward.9} parent=0 // pred_check_branch
    %17 = sbr.rel (%p15) target = $region17
  $region16: #{discriminator_forward.9} parent=0 // pred_region
    %18 = vst [vmem:[#allocation2] sm:$0x3] 0.0
  $region17: #{discriminator_forward.9} parent=0 // pred_fallthru
    _
  %v19 = vld [vmem:[#allocation2] sm:$0x3]
  %v20 = vld [vmem:[%s0] sm:$0x3]
  %v21 = vld [vmem:[%s1] sm:$0xff]
  %v22 = vld [vmem:[%s1 + $0x8] sm:$0xff]
  %v23 = vld [vmem:[%s1 + $0x10] sm:$0xff]
  %v24 = vld [vmem:[%s1 + $0x18] sm:$0xff]
  %v25 = vld [vmem:[%s1 + $0x20] sm:$0xff]
  %v26 = vld [vmem:[%s1 + $0x28] sm:$0xff]
  %v27 = vld [vmem:[%s1 + $0x30] sm:$0xff]
  %v28 = vld [vmem:[%s1 + $0x38] sm:$0xff]
  %v29 = vld [vmem:[%s1 + $0x40] sm:$0xff]
  %v30 = vld [vmem:[%s1 + $0x48] sm:$0xff]
  %v31 = vld [vmem:[%s1 + $0x50] sm:$0xff]
  %v32 = vld [vmem:[%s1 + $0x58] sm:$0xff]
  %v33 = vld [vmem:[%s1 + $0x60] sm:$0xff]
  %v34 = vld [vmem:[%s1 + $0x68] sm:$0xff]
  %v35 = vld [vmem:[%s1 + $0x70] sm:$0xff]
  %v36 = vld [vmem:[%s1 + $0x78] sm:$0xff]
  %37 = vmatprep.subr.mxu0 0.0
  %38 = vmatpush1.msra.mxu0 %v21
  %39 = vmatprep.subr.mxu0 0.0
  %40 = vmatpush1.msra.mxu0 %v22
  %41 = vmatprep.subr.mxu0 0.0
  %42 = vmatpush1.msra.mxu0 %v23
  %43 = vmatprep.subr.mxu0 0.0
  %44 = vmatpush1.msra.mxu0 %v24
  %45 = vmatprep.subr.mxu0 0.0
  %46 = vmatpush1.msra.mxu0 %v25
  %47 = vmatprep.subr.mxu0 0.0
  %48 = vmatpush1.msra.mxu0 %v26
  %49 = vmatprep.subr.mxu0 0.0
  %50 = vmatpush1.msra.mxu0 %v27
  %51 = vmatprep.subr.mxu0 0.0
  %52 = vmatpush1.msra.mxu0 %v28
  %53 = vmatprep.subr.mxu0 0.0
  %54 = vmatpush1.msra.mxu0 %v29
  %55 = vmatprep.subr.mxu0 0.0
  %56 = vmatpush1.msra.mxu0 %v30
  %57 = vmatprep.subr.mxu0 0.0
  %58 = vmatpush1.msra.mxu0 %v31
  %59 = vmatprep.subr.mxu0 0.0
  %60 = vmatpush1.msra.mxu0 %v32
  %61 = vmatprep.subr.mxu0 0.0
  %62 = vmatpush1.msra.mxu0 %v33
  %63 = vmatprep.subr.mxu0 0.0
  %64 = vmatpush1.msra.mxu0 %v34
  %65 = vmatprep.subr.mxu0 0.0
  %66 = vmatpush1.msra.mxu0 %v35
  %67 = vmatprep.subr.mxu0 0.0
  %68 = vmatpush1.msra.mxu0 %v36
  %69 = vmatprep.subr.mxu0 0.0
  %70 = vmatpush1.msra.mxu0 0.0
  %71 = vmatprep.subr.mxu0 0.0
  %72 = vmatpush1.msra.mxu0 0.0
  %73 = vmatprep.subr.mxu0 0.0
  %74 = vmatpush1.msra.mxu0 0.0
  %75 = vmatprep.subr.mxu0 0.0
  %76 = vmatpush1.msra.mxu0 0.0
  %77 = vmatprep.subr.mxu0 0.0
  %78 = vmatpush1.msra.mxu0 0.0
  %79 = vmatprep.subr.mxu0 0.0
  %80 = vmatpush1.msra.mxu0 0.0
  %81 = vmatprep.subr.mxu0 0.0
  %82 = vmatpush1.msra.mxu0 0.0
  %83 = vmatprep.subr.mxu0 0.0
  %84 = vmatpush1.msra.mxu0 0.0
  %85 = vmatprep.subr.mxu0 0.0
  %86 = vmatpush1.msra.mxu0 0.0
  %87 = vmatprep.subr.mxu0 0.0
  %88 = vmatpush1.msra.mxu0 0.0
  %89 = vmatprep.subr.mxu0 0.0
  %90 = vmatpush1.msra.mxu0 0.0
  %91 = vmatprep.subr.mxu0 0.0
  %92 = vmatpush1.msra.mxu0 0.0
  %93 = vmatprep.subr.mxu0 0.0
  %94 = vmatpush1.msra.mxu0 0.0
  %95 = vmatprep.subr.mxu0 0.0
  %96 = vmatpush1.msra.mxu0 0.0
  %97 = vmatprep.subr.mxu0 0.0
  %98 = vmatpush1.msra.mxu0 0.0
  %99 = vmatprep.subr.mxu0 0.0
  %100 = vmatpush1.msra.mxu0 0.0
  %101 = vmatprep.mubr.f32.mxu0 0.0
  %102 = vmatmul.mubr.f32.gmra.mrb[0].mxu0 %v20
  %v103 = vpop.f32.mrb[0].mxu0
  %v104 = vadd.f32 0.0, %v103
  %v105 = vpop.f32.mrb[0].mxu0
  %106 = vdwg.mxu0
  %v107 = vadd.f32 %v19, %v104
  %108 = vst [vmem:[#allocation2] sm:$0x3] %v107
  // Predicated region
  $region18: #{discriminator_forward.9} parent=0 // pred_check
    %p109 = pneg %p14
  $region19: #{discriminator_forward.9} parent=0 // pred_check_branch
    %111 = sbr.rel (%p109) target = $region21
  $region20: #{discriminator_forward.9} parent=0 // pred_region
    %v112 = vld [vmem:[#allocation2] sm:$0x3]
    %v113 = vld [vmem:[%s2] sm:$0x1]
    %v115 = vlaneseq
    %v116 = vshrl.u32 %v115, 7
    %v117 = vsub.s32 0, %v116
    %v118 = vrot.slane %v113, %v117
    %v120 = vadd.f32 %v112, %v118
    %121 = vst [vmem:[%s3] sm:$0x3] %v120
  $region21: #{discriminator_forward.9} parent=0 // pred_fallthru
    _
  // Predicated region
  $region22: #{discriminator_forward.9} parent=0 // pred_check
    _
  $region23: #{discriminator_forward.9} parent=0 // pred_check_branch
    %123 = sbr.rel (0) target = $region25
  $region24: #{discriminator_forward.9} parent=0 // pred_region
    _
  $region25: #{discriminator_forward.9} parent=0 // pred_fallthru
    _
  // Predicated region
  $region26: #{discriminator_forward.9} parent=0 // pred_check
    _
  $region27: #{discriminator_forward.9} parent=0 // pred_check_branch
    %125 = sbr.rel (0) target = $region29
  $region28: #{discriminator_forward.9} parent=0 // pred_region
    _
  $region29: #{discriminator_forward.9} parent=0 // pred_fallthru
    _

// kernel: discriminator_forward.8
$region0: #{discriminator_forward.8}
  #allocation0 [shape = 'u32[]', space=smem, size = 0x4, offset = 0x4, fixed_abs, tag = 'smem constant byte address 0x4 - core index']
  #allocation1 [shape = 'u32[144,128]{1,0:T(1,128)}', space=vmem, size = 0x12000, scoped, tag = 'internal scratch']
  #allocation2 [shape = 'f32[8,128]{1,0:T(8,128)}', space=vmem, size = 0x1000, scoped, tag = 'scratch operand']
  %s0 = inlined_call_operand.vmem [shape: f32[8,288], index: 0, kind: input, shape index: {}]
  %s1 = inlined_call_operand.vmem [shape: f32[288,128], index: 1, kind: input, shape index: {}]
  %s2 = inlined_call_operand.vmem [shape: f32[1,128], index: 2, kind: input, shape index: {}]
  %s3 = inlined_call_operand.vmem [shape: f32[8,128], index: 3, kind: output, shape index: {}]
  %s4 = sld [smem:[#allocation0]]
  $region30: #{discriminator_forward.8} parent=0
    _
  %s6 = ssub.s32 1, %s4
  %s7 = scalar_select 0, %s6, %s4
  // Predicated region
  $region2: #{discriminator_forward.8} parent=0 // pred_check
    _
  $region3: #{discriminator_forward.8} parent=0 // pred_check_branch
    %9 = sbr.rel (0) target = $region5
  $region4: #{discriminator_forward.8} parent=0 // pred_region
    _
  $region5: #{discriminator_forward.8} parent=0 // pred_fallthru
    _
  // Predicated region
  $region6: #{discriminator_forward.8} parent=0 // pred_check
    _
  $region7: #{discriminator_forward.8} parent=0 // pred_check_branch
    %11 = sbr.rel (0) target = $region9
  $region8: #{discriminator_forward.8} parent=0 // pred_region
    _
  $region9: #{discriminator_forward.8} parent=0 // pred_fallthru
    _
  // Predicated region
  $region10: #{discriminator_forward.8} parent=0 // pred_check
    _
  $region11: #{discriminator_forward.8} parent=0 // pred_check_branch
    %13 = sbr.rel (0) target = $region13
  $region12: #{discriminator_forward.8} parent=0 // pred_region
    _
  $region13: #{discriminator_forward.8} parent=0 // pred_fallthru
    _
  %p14 = scmp.eq.s32.totalorder 0, 0
  // Predicated region
  $region14: #{discriminator_forward.8} parent=0 // pred_check
    %p15 = pneg %p14
  $region15: #{discriminator_forward.8} parent=0 // pred_check_branch
    %17 = sbr.rel (%p15) target = $region17
  $region16: #{discriminator_forward.8} parent=0 // pred_region
    %18 = vst [vmem:[#allocation2] sm:$0xff] 0.0
  $region17: #{discriminator_forward.8} parent=0 // pred_fallthru
    _
  %v19 = vld [vmem:[#allocation2] sm:$0xff]
  %v20 = vld [vmem:[%s0] sm:$0xff]
  %v21 = vld [vmem:[%s0 + $0x8] sm:$0xff]
  %v22 = vld [vmem:[%s0 + $0x10] sm:$0xff]
  %v23 = vld [vmem:[%s1] sm:$0xff]
  %v24 = vld [vmem:[%s1 + $0x8] sm:$0xff]
  %v25 = vld [vmem:[%s1 + $0x10] sm:$0xff]
  %v26 = vld [vmem:[%s1 + $0x18] sm:$0xff]
  %v27 = vld [vmem:[%s1 + $0x20] sm:$0xff]
  %v28 = vld [vmem:[%s1 + $0x28] sm:$0xff]
  %v29 = vld [vmem:[%s1 + $0x30] sm:$0xff]
  %v30 = vld [vmem:[%s1 + $0x38] sm:$0xff]
  %v31 = vld [vmem:[%s1 + $0x40] sm:$0xff]
  %v32 = vld [vmem:[%s1 + $0x48] sm:$0xff]
  %v33 = vld [vmem:[%s1 + $0x50] sm:$0xff]
  %v34 = vld [vmem:[%s1 + $0x58] sm:$0xff]
  %v35 = vld [vmem:[%s1 + $0x60] sm:$0xff]
  %v36 = vld [vmem:[%s1 + $0x68] sm:$0xff]
  %v37 = vld [vmem:[%s1 + $0x70] sm:$0xff]
  %v38 = vld [vmem:[%s1 + $0x78] sm:$0xff]
  %v39 = vld [vmem:[%s1 + $0x80] sm:$0xff]
  %v40 = vld [vmem:[%s1 + $0x88] sm:$0xff]
  %v41 = vld [vmem:[%s1 + $0x90] sm:$0xff]
  %v42 = vld [vmem:[%s1 + $0x98] sm:$0xff]
  %v43 = vld [vmem:[%s1 + $0xa0] sm:$0xff]
  %v44 = vld [vmem:[%s1 + $0xa8] sm:$0xff]
  %v45 = vld [vmem:[%s1 + $0xb0] sm:$0xff]
  %v46 = vld [vmem:[%s1 + $0xb8] sm:$0xff]
  %v47 = vld [vmem:[%s1 + $0xc0] sm:$0xff]
  %v48 = vld [vmem:[%s1 + $0xc8] sm:$0xff]
  %v49 = vld [vmem:[%s1 + $0xd0] sm:$0xff]
  %v50 = vld [vmem:[%s1 + $0xd8] sm:$0xff]
  %v51 = vld [vmem:[%s1 + $0xe0] sm:$0xff]
  %v52 = vld [vmem:[%s1 + $0xe8] sm:$0xff]
  %v53 = vld [vmem:[%s1 + $0xf0] sm:$0xff]
  %v54 = vld [vmem:[%s1 + $0xf8] sm:$0xff]
  %v55 = vld [vmem:[%s1 + $0x100] sm:$0xff]
  %v56 = vld [vmem:[%s1 + $0x108] sm:$0xff]
  %v57 = vld [vmem:[%s1 + $0x110] sm:$0xff]
  %v58 = vld [vmem:[%s1 + $0x118] sm:$0xff]
  %vm59 = vcmask 261120
  %v61 = vsel %vm59, %v22, 0
  %63 = vmatprep.subr.mxu0 0.0
  %64 = vmatpush1.msra.mxu0 %v23
  %65 = vmatprep.subr.mxu0 0.0
  %66 = vmatpush1.msra.mxu0 %v24
  %67 = vmatprep.subr.mxu0 0.0
  %68 = vmatpush1.msra.mxu0 %v25
  %69 = vmatprep.subr.mxu0 0.0
  %70 = vmatpush1.msra.mxu0 %v26
  %71 = vmatprep.subr.mxu0 0.0
  %72 = vmatpush1.msra.mxu0 %v27
  %73 = vmatprep.subr.mxu0 0.0
  %74 = vmatpush1.msra.mxu0 %v28
  %75 = vmatprep.subr.mxu0 0.0
  %76 = vmatpush1.msra.mxu0 %v29
  %77 = vmatprep.subr.mxu0 0.0
  %78 = vmatpush1.msra.mxu0 %v30
  %79 = vmatprep.subr.mxu0 0.0
  %80 = vmatpush1.msra.mxu0 %v31
  %81 = vmatprep.subr.mxu0 0.0
  %82 = vmatpush1.msra.mxu0 %v32
  %83 = vmatprep.subr.mxu0 0.0
  %84 = vmatpush1.msra.mxu0 %v33
  %85 = vmatprep.subr.mxu0 0.0
  %86 = vmatpush1.msra.mxu0 %v34
  %87 = vmatprep.subr.mxu0 0.0
  %88 = vmatpush1.msra.mxu0 %v35
  %89 = vmatprep.subr.mxu0 0.0
  %90 = vmatpush1.msra.mxu0 %v36
  %91 = vmatprep.subr.mxu0 0.0
  %92 = vmatpush1.msra.mxu0 %v37
  %93 = vmatprep.subr.mxu0 0.0
  %94 = vmatpush1.msra.mxu0 %v38
  %95 = vmatprep.subr.mxu0 0.0
  %96 = vmatpush1.msra.mxu0 %v39
  %97 = vmatprep.subr.mxu0 0.0
  %98 = vmatpush1.msra.mxu0 %v40
  %99 = vmatprep.subr.mxu0 0.0
  %100 = vmatpush1.msra.mxu0 %v41
  %101 = vmatprep.subr.mxu0 0.0
  %102 = vmatpush1.msra.mxu0 %v42
  %103 = vmatprep.subr.mxu0 0.0
  %104 = vmatpush1.msra.mxu0 %v43
  %105 = vmatprep.subr.mxu0 0.0
  %106 = vmatpush1.msra.mxu0 %v44
  %107 = vmatprep.subr.mxu0 0.0
  %108 = vmatpush1.msra.mxu0 %v45
  %109 = vmatprep.subr.mxu0 0.0
  %110 = vmatpush1.msra.mxu0 %v46
  %111 = vmatprep.subr.mxu0 0.0
  %112 = vmatpush1.msra.mxu0 %v47
  %113 = vmatprep.subr.mxu0 0.0
  %114 = vmatpush1.msra.mxu0 %v48
  %115 = vmatprep.subr.mxu0 0.0
  %116 = vmatpush1.msra.mxu0 %v49
  %117 = vmatprep.subr.mxu0 0.0
  %118 = vmatpush1.msra.mxu0 %v50
  %119 = vmatprep.subr.mxu0 0.0
  %120 = vmatpush1.msra.mxu0 %v51
  %121 = vmatprep.subr.mxu0 0.0
  %122 = vmatpush1.msra.mxu0 %v52
  %123 = vmatprep.subr.mxu0 0.0
  %124 = vmatpush1.msra.mxu0 %v53
  %125 = vmatprep.subr.mxu0 0.0
  %126 = vmatpush1.msra.mxu0 %v54
  %127 = vmatprep.mubr.f32.mxu0 %v21
  %128 = vmatmul.mubr.f32.gmra.mrb[0].mxu0 %v20
  %v129 = vpop.f32.mrb[0].mxu0
  %v130 = vadd.f32 0.0, %v129
  %v131 = vpop.f32.mrb[0].mxu0
  %132 = vdwg.mxu0
  %133 = vmatprep.subr.mxu0 0.0
  %134 = vmatpush1.msra.mxu0 %v55
  %135 = vmatprep.subr.mxu0 0.0
  %136 = vmatpush1.msra.mxu0 %v56
  %137 = vmatprep.subr.mxu0 0.0
  %138 = vmatpush1.msra.mxu0 %v57
  %139 = vmatprep.subr.mxu0 0.0
  %140 = vmatpush1.msra.mxu0 %v58
  %141 = vmatprep.subr.mxu0 0.0
  %142 = vmatpush1.msra.mxu0 0.0
  %143 = vmatprep.subr.mxu0 0.0
  %144 = vmatpush1.msra.mxu0 0.0
  %145 = vmatprep.subr.mxu0 0.0
  %146 = vmatpush1.msra.mxu0 0.0
  %147 = vmatprep.subr.mxu0 0.0
  %148 = vmatpush1.msra.mxu0 0.0
  %149 = vmatprep.subr.mxu0 0.0
  %150 = vmatpush1.msra.mxu0 0.0
  %151 = vmatprep.subr.mxu0 0.0
  %152 = vmatpush1.msra.mxu0 0.0
  %153 = vmatprep.subr.mxu0 0.0
  %154 = vmatpush1.msra.mxu0 0.0
  %155 = vmatprep.subr.mxu0 0.0
  %156 = vmatpush1.msra.mxu0 0.0
  %157 = vmatprep.subr.mxu0 0.0
  %158 = vmatpush1.msra.mxu0 0.0
  %159 = vmatprep.subr.mxu0 0.0
  %160 = vmatpush1.msra.mxu0 0.0
  %161 = vmatprep.subr.mxu0 0.0
  %162 = vmatpush1.msra.mxu0 0.0
  %163 = vmatprep.subr.mxu0 0.0
  %164 = vmatpush1.msra.mxu0 0.0
  %165 = vmatprep.subr.mxu0 0.0
  %166 = vmatpush1.msra.mxu0 0.0
  %167 = vmatprep.subr.mxu0 0.0
  %168 = vmatpush1.msra.mxu0 0.0
  %169 = vmatprep.subr.mxu0 0.0
  %170 = vmatpush1.msra.mxu0 0.0
  %171 = vmatprep.subr.mxu0 0.0
  %172 = vmatpush1.msra.mxu0 0.0
  %173 = vmatprep.subr.mxu0 0.0
  %174 = vmatpush1.msra.mxu0 0.0
  %175 = vmatprep.subr.mxu0 0.0
  %176 = vmatpush1.msra.mxu0 0.0
  %177 = vmatprep.subr.mxu0 0.0
  %178 = vmatpush1.msra.mxu0 0.0
  %179 = vmatprep.subr.mxu0 0.0
  %180 = vmatpush1.msra.mxu0 0.0
  %181 = vmatprep.subr.mxu0 0.0
  %182 = vmatpush1.msra.mxu0 0.0
  %183 = vmatprep.subr.mxu0 0.0
  %184 = vmatpush1.msra.mxu0 0.0
  %185 = vmatprep.subr.mxu0 0.0
  %186 = vmatpush1.msra.mxu0 0.0
  %187 = vmatprep.subr.mxu0 0.0
  %188 = vmatpush1.msra.mxu0 0.0
  %189 = vmatprep.subr.mxu0 0.0
  %190 = vmatpush1.msra.mxu0 0.0
  %191 = vmatprep.subr.mxu0 0.0
  %192 = vmatpush1.msra.mxu0 0.0
  %193 = vmatprep.subr.mxu0 0.0
  %194 = vmatpush1.msra.mxu0 0.0
  %195 = vmatprep.subr.mxu0 0.0
  %196 = vmatpush1.msra.mxu0 0.0
  %197 = vmatprep.mubr.f32.mxu0 0.0
  %198 = vmatmul.mubr.f32.gmra.mrb[0].mxu0 %v61
  %v199 = vpop.f32.mrb[0].mxu0
  %v200 = vadd.f32 %v130, %v199
  %v201 = vpop.f32.mrb[0].mxu0
  %202 = vdwg.mxu0
  %v203 = vadd.f32 %v19, %v200
  %204 = vst [vmem:[#allocation2] sm:$0xff] %v203
  // Predicated region
  $region18: #{discriminator_forward.8} parent=0 // pred_check
    %p205 = pneg %p14
  $region19: #{discriminator_forward.8} parent=0 // pred_check_branch
    %207 = sbr.rel (%p205) target = $region21
  $region20: #{discriminator_forward.8} parent=0 // pred_region
    %v208 = vld [vmem:[#allocation2] sm:$0xff]
    %v209 = vld [vmem:[%s2] sm:$0x1]
    %v211 = vlaneseq
    %v212 = vshrl.u32 %v211, 7
    %v213 = vsub.s32 0, %v212
    %v214 = vrot.slane %v209, %v213
    %v216 = vadd.f32 %v208, %v214
    %217 = vst [vmem:[%s3] sm:$0xff] %v216
  $region21: #{discriminator_forward.8} parent=0 // pred_fallthru
    _
  // Predicated region
  $region22: #{discriminator_forward.8} parent=0 // pred_check
    _
  $region23: #{discriminator_forward.8} parent=0 // pred_check_branch
    %219 = sbr.rel (0) target = $region25
  $region24: #{discriminator_forward.8} parent=0 // pred_region
    _
  $region25: #{discriminator_forward.8} parent=0 // pred_fallthru
    _
  // Predicated region
  $region26: #{discriminator_forward.8} parent=0 // pred_check
    _
  $region27: #{discriminator_forward.8} parent=0 // pred_check_branch
    %221 = sbr.rel (0) target = $region29
  $region28: #{discriminator_forward.8} parent=0 // pred_region
    _
  $region29: #{discriminator_forward.8} parent=0 // pred_fallthru
    _

</llo_original>
